<compile_context>
chip_gen: v5e
topology: v5e:2x2
jax: 0.10.0
libtpu: 0.0.40
codegen_flags: <defaults>
</compile_context>

<pallas_src>
import functools

import jax
import jax.numpy as jnp
from jax.experimental import pallas as pl
from jax.experimental.pallas import tpu as pltpu


def _lstm_kernel(x_ref,      # ((T+1)*B, I)  time-major, batch-padded input (+1 zero step)
                 wx_ref,     # (I, 8H)       input-proj weight (layer-1 cols zero)
                 b_ref,      # (1, 8H)       packed biases (b0 in layer-0 cols, b1 in layer-1)
                 wh_ref,     # (2H, 8H)      wavefront weight [[Whh0^T, Wih1^T],[0, Whh1^T]]
                 fcw_ref,    # (2H, Opad)    fc weight, rows 0:H zero, lane-padded
                 fcb_ref,    # (1, Opad)     fc bias, lane-padded
                 out_ref,    # (B, Opad)     output
                 xproj_ref): # ((T+1)*B, 8H) scratch: precomputed input projection + biases
    B = out_ref.shape[0]
    H = wh_ref.shape[0] // 2
    TB, I = x_ref.shape
    S = TB // B                      # = T + 1 wavefront steps

    # ---- off the serial path: input projection (+ biases) for ALL timesteps ----
    if I == 1:
        # x @ W^T with input_size == 1 is an outer product: VPU broadcast multiply.
        xproj_ref[...] = x_ref[...] * wx_ref[...] + b_ref[...]
    else:
        xproj_ref[...] = (
            jnp.dot(x_ref[...], wx_ref[...], preferred_element_type=jnp.float32)
            + b_ref[...])

    def sigmoid(v):
        # one EUP transcendental per element; mul/add go to free VALU slots
        return 0.5 * jnp.tanh(0.5 * v) + 0.5

    def activate(gates, c_prev):
        # packed gate columns: [i0,i1 | f0,f1 | o0,o1 | g0,g1]
        ifo = sigmoid(gates[:, :6 * H])          # (B, 6H): 3 full vregs, one region
        g = jnp.tanh(gates[:, 6 * H:])           # (B, 2H): 1 full vreg
        i = ifo[:, :2 * H]
        f = ifo[:, 2 * H:4 * H]
        o = ifo[:, 4 * H:6 * H]
        c_new = f * c_prev + i * g               # full-vreg packed update
        h_new = o * jnp.tanh(c_new)
        return h_new, c_new

    # ---- wavefront prologue: s = 0 runs layer-0 @ t=0 only (h_prev = c_prev = 0) ----
    gates0 = xproj_ref[pl.ds(0, B), :]
    h_pk, c_pk = activate(gates0, jnp.zeros((B, 2 * H), jnp.float32))
    lane = jax.lax.broadcasted_iota(jnp.int32, (1, 2 * H), 1)
    mask0 = (lane < H).astype(jnp.float32)       # keep layer-0 half, force h1[-1]=c1[-1]=0
    h_pk = h_pk * mask0
    c_pk = c_pk * mask0

    # ---- main wavefront: step s computes layer-0 @ t=s and layer-1 @ t=s-1 ----
    # (dropout between layers is identity at inference)
    def body(s, carry):
        h_pk, c_pk = carry
        off = pl.multiple_of(s * B, B)           # B is a multiple of 8 -> aligned slice
        gates = xproj_ref[pl.ds(off, B), :] + jnp.dot(
            h_pk, wh_ref[...], preferred_element_type=jnp.float32)
        return activate(gates, c_pk)

    h_pk, _ = jax.lax.fori_loop(1, S, body, (h_pk, c_pk), unroll=True)

    # final packed state: lanes H:2H hold h1[T-1]; fcw rows 0:H are zero so the
    # discarded layer-0 half contributes nothing -> full-vreg matmul, no lane slice.
    out_ref[...] = (jnp.dot(h_pk, fcw_ref[...], preferred_element_type=jnp.float32)
                    + fcb_ref[...])


def prepare_params(params, *, hidden_size, output_size):
    """One-time packing of PyTorch-layout parameters (hoisted out of the forward)."""
    H, O = hidden_size, output_size
    O_pad = ((max(O, 128) + 127) // 128) * 128
    f32 = jnp.float32

    def gate_pack(m0, m1):
        # m0/m1 have 4H last axis in PyTorch order [i, f, g, o]; emit packed
        # columns [i0,i1 | f0,f1 | o0,o1 | g0,g1] (sigmoid gates first, tanh last).
        def blk(m, k):
            return m[..., k * H:(k + 1) * H]
        i, f, g, o = 0, 1, 2, 3
        return jnp.concatenate(
            [blk(m0, i), blk(m1, i), blk(m0, f), blk(m1, f),
             blk(m0, o), blk(m1, o), blk(m0, g), blk(m1, g)], axis=-1)

    wih0T = params["weight_ih_l0"].astype(f32).T          # (I, 4H)
    whh0T = params["weight_hh_l0"].astype(f32).T          # (H, 4H)
    wih1T = params["weight_ih_l1"].astype(f32).T          # (H, 4H)
    whh1T = params["weight_hh_l1"].astype(f32).T          # (H, 4H)
    b0 = (params["bias_ih_l0"] + params["bias_hh_l0"]).astype(f32).reshape(1, 4 * H)
    b1 = (params["bias_ih_l1"] + params["bias_hh_l1"]).astype(f32).reshape(1, 4 * H)
    I = wih0T.shape[0]

    # input projection: layer-0 columns = Wih0^T, layer-1 columns = 0 (b1 rides in bias)
    wx_pack = gate_pack(wih0T, jnp.zeros((I, 4 * H), f32))                 # (I, 8H)
    b_pack = gate_pack(b0, b1)                                             # (1, 8H)
    # wavefront recurrent weight: rows 0:H multiply h0[s-1], rows H:2H multiply h1[s-2]
    wh_pack = jnp.concatenate(
        [gate_pack(whh0T, wih1T),
         gate_pack(jnp.zeros((H, 4 * H), f32), whh1T)], axis=0)            # (2H, 8H)
    # fc consumes the packed state: layer-0 rows are zero, lane-padded output
    fcw_pack = jnp.concatenate(
        [jnp.zeros((H, O), f32), params["fc_weight"].astype(f32).T], axis=0)
    fcw_pack = jnp.pad(fcw_pack, ((0, 0), (0, O_pad - O)))                 # (2H, Opad)
    fcb = jnp.pad(params["fc_bias"].astype(f32).reshape(1, O),
                  ((0, 0), (0, O_pad - O)))                                # (1, Opad)

    return {"wx": wx_pack, "b": b_pack, "wh": wh_pack, "fcw": fcw_pack, "fcb": fcb}


@functools.partial(jax.jit, static_argnames=("output_size",))
def lstm_model_forward(x, packed, *, output_size):
    """x: (B, T, I) float32 (PyTorch batch_first layout). Returns (B, output_size)."""
    B, T, I = x.shape
    O = output_size
    G = packed["wh"].shape[1]                   # 8H
    O_pad = packed["fcw"].shape[1]
    B_pad = ((max(B, 8) + 7) // 8) * 8          # sublane multiple

    # time-major, batch-padded, plus ONE extra zero timestep so the last wavefront
    # step (layer-1 @ t=T-1 alone) reads a finite, discarded layer-0 slab.
    x_tm = jnp.transpose(x, (1, 0, 2)).astype(jnp.float32)     # (T, B, I)
    x_tm = jnp.pad(x_tm, ((0, 1), (0, B_pad - B), (0, 0)))     # (T+1, B_pad, I)
    x2d = x_tm.reshape((T + 1) * B_pad, I)

    vmem = pl.BlockSpec(memory_space=pltpu.MemorySpace.VMEM)
    out = pl.pallas_call(
        _lstm_kernel,
        out_shape=jax.ShapeDtypeStruct((B_pad, O_pad), jnp.float32),
        in_specs=[vmem] * 6,
        out_specs=vmem,
        scratch_shapes=[pltpu.VMEM(((T + 1) * B_pad, G), jnp.float32)],  # xproj
    )(x2d, packed["wx"], packed["b"], packed["wh"], packed["fcw"], packed["fcb"])

    return out[:B, :O]


def lstm_model_reference(x, params, *, hidden_size, output_size):
    """Pure-JAX reference with PyTorch semantics (gate order i,f,g,o)."""
    del output_size
    H = hidden_size
    B, T, _ = x.shape

    def cell(x_t, h, c, wih, whh, b):
        gates = x_t @ wih.T + h @ whh.T + b
        i = jax.nn.sigmoid(gates[:, 0 * H:1 * H])
        f = jax.nn.sigmoid(gates[:, 1 * H:2 * H])
        g = jnp.tanh(gates[:, 2 * H:3 * H])
        o = jax.nn.sigmoid(gates[:, 3 * H:4 * H])
        c = f * c + i * g
        h = o * jnp.tanh(c)
        return h, c

    h0 = c0 = h1 = c1 = jnp.zeros((B, H), jnp.float32)
    b0 = params["bias_ih_l0"] + params["bias_hh_l0"]
    b1 = params["bias_ih_l1"] + params["bias_hh_l1"]
    for t in range(T):
        h0, c0 = cell(x[:, t, :], h0, c0,
                      params["weight_ih_l0"], params["weight_hh_l0"], b0)
        h1, c1 = cell(h0, h1, c1,
                      params["weight_ih_l1"], params["weight_hh_l1"], b1)
    return h1 @ params["fc_weight"].T + params["fc_bias"]


def init_params(key, input_size, hidden_size, output_size):
    """Deterministic init matching PyTorch parameter shapes (uniform(-1/sqrt(H), 1/sqrt(H)))."""
    H, I, O = hidden_size, input_size, output_size
    bound = 1.0 / jnp.sqrt(jnp.float32(H))
    shapes = {
        "weight_ih_l0": (4 * H, I),
        "weight_hh_l0": (4 * H, H),
        "bias_ih_l0": (4 * H,),
        "bias_hh_l0": (4 * H,),
        "weight_ih_l1": (4 * H, H),
        "weight_hh_l1": (4 * H, H),
        "bias_ih_l1": (4 * H,),
        "bias_hh_l1": (4 * H,),
        "fc_weight": (O, H),
        "fc_bias": (O,),
    }
    params = {}
    keys = jax.random.split(key, len(shapes))
    for k, (name, shape) in zip(keys, shapes.items()):
        params[name] = jax.random.uniform(
            k, shape, dtype=jnp.float32, minval=-bound, maxval=bound)
    return params


if __name__ == "__main__":
    # Shapes consistent with the module: input_size=1, hidden_size=64,
    # num_layers=2, output_size=1; batch=2, seq_len=8.
    B, T, I, H, O = 2, 8, 1, 64, 1

    key = jax.random.PRNGKey(0)
    k_x, k_p = jax.random.split(key)
    x = jax.random.normal(k_x, (B, T, I), dtype=jnp.float32)
    params = init_params(k_p, I, H, O)

    packed = prepare_params(params, hidden_size=H, output_size=O)  # one-time packing
    out = lstm_model_forward(x, packed, output_size=O)
    out = jax.block_until_ready(out)
    assert out.shape == (B, O), out.shape

    ref = lstm_model_reference(x, params, hidden_size=H, output_size=O)
    assert bool(jnp.allclose(out, ref, rtol=1e-4, atol=1e-4)), (out, ref)

    print("KERNEL_OK")
</pallas_src>

<mosaic_0001>
module attributes {stable_mosaic.version = 11 : i64} {
  func.func @_lstm_kernel(%arg0: memref<72x1xf32, #tpu.memory_space<vmem>>, %arg1: memref<1x512xf32, #tpu.memory_space<vmem>>, %arg2: memref<1x512xf32, #tpu.memory_space<vmem>>, %arg3: memref<128x512xf32, #tpu.memory_space<vmem>>, %arg4: memref<128x128xf32, #tpu.memory_space<vmem>>, %arg5: memref<1x128xf32, #tpu.memory_space<vmem>>, %arg6: memref<8x128xf32, #tpu.memory_space<vmem>>, %arg7: memref<72x512xf32, #tpu.memory_space<vmem>>) attributes {dimension_semantics = [], scalar_prefetch = 0 : i64, scratch_operands = 1 : i64, tpu.core_type = #tpu.core_type<tc>} {
    %c0 = arith.constant 0 : index
    %c0_0 = arith.constant 0 : index
    %0 = vector.load %arg0[%c0, %c0_0] : memref<72x1xf32, #tpu.memory_space<vmem>>, vector<72x1xf32>
    %c0_1 = arith.constant 0 : index
    %c0_2 = arith.constant 0 : index
    %1 = vector.load %arg1[%c0_1, %c0_2] : memref<1x512xf32, #tpu.memory_space<vmem>>, vector<1x512xf32>
    %2 = vector.broadcast %0 : vector<72x1xf32> to vector<72x512xf32>
    %3 = vector.broadcast %1 : vector<1x512xf32> to vector<72x512xf32>
    %4 = arith.mulf %2, %3 : vector<72x512xf32>
    %c0_3 = arith.constant 0 : index
    %c0_4 = arith.constant 0 : index
    %5 = vector.load %arg2[%c0_3, %c0_4] : memref<1x512xf32, #tpu.memory_space<vmem>>, vector<1x512xf32>
    %6 = vector.broadcast %5 : vector<1x512xf32> to vector<72x512xf32>
    %7 = arith.addf %4, %6 : vector<72x512xf32>
    %c0_5 = arith.constant 0 : index
    %c0_6 = arith.constant 0 : index
    %8 = vector.load %arg7[%c0_5, %c0_6] : memref<72x512xf32, #tpu.memory_space<vmem>>, vector<72x512xf32>
    tpu.vector_store %arg7[%c0_5, %c0_6], %7 {strides = array<i32>} : memref<72x512xf32, #tpu.memory_space<vmem>>, vector<72x512xf32>,
    %c0_7 = arith.constant 0 : index
    %c0_8 = arith.constant 0 : index
    %9 = vector.load %arg7[%c0_7, %c0_8] : memref<72x512xf32, #tpu.memory_space<vmem>>, vector<8x512xf32>
    %cst = arith.constant 0.000000e+00 : f32
    %10 = vector.broadcast %cst : f32 to vector<8x128xf32>
    %11 = vector.extract_strided_slice %9 {offsets = [0, 0], sizes = [8, 384], strides = [1, 1]} : vector<8x512xf32> to vector<8x384xf32>
    %cst_9 = arith.constant 5.000000e-01 : f32
    %12 = vector.broadcast %cst_9 : f32 to vector<8x384xf32>
    %13 = arith.mulf %12, %11 : vector<8x384xf32>
    %14 = math.tanh %13 : vector<8x384xf32>
    %cst_10 = arith.constant 5.000000e-01 : f32
    %15 = vector.broadcast %cst_10 : f32 to vector<8x384xf32>
    %16 = arith.mulf %15, %14 : vector<8x384xf32>
    %cst_11 = arith.constant 5.000000e-01 : f32
    %17 = vector.broadcast %cst_11 : f32 to vector<8x384xf32>
    %18 = arith.addf %16, %17 : vector<8x384xf32>
    %19 = vector.extract_strided_slice %9 {offsets = [0, 384], sizes = [8, 128], strides = [1, 1]} : vector<8x512xf32> to vector<8x128xf32>
    %20 = math.tanh %19 : vector<8x128xf32>
    %21 = vector.extract_strided_slice %18 {offsets = [0, 0], sizes = [8, 128], strides = [1, 1]} : vector<8x384xf32> to vector<8x128xf32>
    %22 = vector.extract_strided_slice %18 {offsets = [0, 128], sizes = [8, 128], strides = [1, 1]} : vector<8x384xf32> to vector<8x128xf32>
    %23 = vector.extract_strided_slice %18 {offsets = [0, 256], sizes = [8, 128], strides = [1, 1]} : vector<8x384xf32> to vector<8x128xf32>
    %24 = arith.mulf %22, %10 : vector<8x128xf32>
    %25 = arith.mulf %21, %20 : vector<8x128xf32>
    %26 = arith.addf %24, %25 : vector<8x128xf32>
    %27 = math.tanh %26 : vector<8x128xf32>
    %28 = arith.mulf %23, %27 : vector<8x128xf32>
    %29 = tpu.iota {dimensions = array<i32: 1>} : vector<1x128xi32>
    %c64_i32 = arith.constant 64 : i32
    %30 = vector.broadcast %c64_i32 : i32 to vector<1x128xi32>
    %31 = arith.cmpi slt, %29, %30 : vector<1x128xi32>
    %32 = arith.extui %31 : vector<1x128xi1> to vector<1x128xi32>
    %33 = arith.sitofp %32 : vector<1x128xi32> to vector<1x128xf32>
    %34 = vector.broadcast %33 : vector<1x128xf32> to vector<8x128xf32>
    %35 = arith.mulf %28, %34 : vector<8x128xf32>
    %36 = vector.broadcast %33 : vector<1x128xf32> to vector<8x128xf32>
    %37 = arith.mulf %26, %36 : vector<8x128xf32>
    %c1_i32 = arith.constant 1 : i32
    %c8_i32 = arith.constant 8 : i32
    %38 = arith.muli %c1_i32, %c8_i32 : i32
    %39 = tpu.assume_multiple %38, 8 : i32
    %40 = arith.index_cast %39 : i32 to index
    %c0_12 = arith.constant 0 : index
    %41 = vector.load %arg7[%40, %c0_12] : memref<72x512xf32, #tpu.memory_space<vmem>>, vector<8x512xf32>
    %c0_13 = arith.constant 0 : index
    %c0_14 = arith.constant 0 : index
    %42 = vector.load %arg3[%c0_13, %c0_14] : memref<128x512xf32, #tpu.memory_space<vmem>>, vector<128x512xf32>
    %cst_15 = arith.constant dense<0.000000e+00> : vector<8x512xf32>
    %43 = tpu.matmul %35, %42, %cst_15 {dimension_numbers = #tpu.dot_dimension_numbers<[1], [0], [0], [1], [0, 0, 1, 1], [], []>} : vector<8x128xf32>, vector<128x512xf32>, vector<8x512xf32> -> vector<8x512xf32>
    %44 = arith.addf %41, %43 : vector<8x512xf32>
    %45 = vector.extract_strided_slice %44 {offsets = [0, 0], sizes = [8, 384], strides = [1, 1]} : vector<8x512xf32> to vector<8x384xf32>
    %cst_16 = arith.constant 5.000000e-01 : f32
    %46 = vector.broadcast %cst_16 : f32 to vector<8x384xf32>
    %47 = arith.mulf %46, %45 : vector<8x384xf32>
    %48 = math.tanh %47 : vector<8x384xf32>
    %cst_17 = arith.constant 5.000000e-01 : f32
    %49 = vector.broadcast %cst_17 : f32 to vector<8x384xf32>
    %50 = arith.mulf %49, %48 : vector<8x384xf32>
    %cst_18 = arith.constant 5.000000e-01 : f32
    %51 = vector.broadcast %cst_18 : f32 to vector<8x384xf32>
    %52 = arith.addf %50, %51 : vector<8x384xf32>
    %53 = vector.extract_strided_slice %44 {offsets = [0, 384], sizes = [8, 128], strides = [1, 1]} : vector<8x512xf32> to vector<8x128xf32>
    %54 = math.tanh %53 : vector<8x128xf32>
    %55 = vector.extract_strided_slice %52 {offsets = [0, 0], sizes = [8, 128], strides = [1, 1]} : vector<8x384xf32> to vector<8x128xf32>
    %56 = vector.extract_strided_slice %52 {offsets = [0, 128], sizes = [8, 128], strides = [1, 1]} : vector<8x384xf32> to vector<8x128xf32>
    %57 = vector.extract_strided_slice %52 {offsets = [0, 256], sizes = [8, 128], strides = [1, 1]} : vector<8x384xf32> to vector<8x128xf32>
    %58 = arith.mulf %56, %37 : vector<8x128xf32>
    %59 = arith.mulf %55, %54 : vector<8x128xf32>
    %60 = arith.addf %58, %59 : vector<8x128xf32>
    %61 = math.tanh %60 : vector<8x128xf32>
    %62 = arith.mulf %57, %61 : vector<8x128xf32>
    %c2_i32 = arith.constant 2 : i32
    %c8_i32_19 = arith.constant 8 : i32
    %63 = arith.muli %c2_i32, %c8_i32_19 : i32
    %64 = tpu.assume_multiple %63, 8 : i32
    %65 = arith.index_cast %64 : i32 to index
    %c0_20 = arith.constant 0 : index
    %66 = vector.load %arg7[%65, %c0_20] : memref<72x512xf32, #tpu.memory_space<vmem>>, vector<8x512xf32>
    %c0_21 = arith.constant 0 : index
    %c0_22 = arith.constant 0 : index
    %67 = vector.load %arg3[%c0_21, %c0_22] : memref<128x512xf32, #tpu.memory_space<vmem>>, vector<128x512xf32>
    %cst_23 = arith.constant dense<0.000000e+00> : vector<8x512xf32>
    %68 = tpu.matmul %62, %67, %cst_23 {dimension_numbers = #tpu.dot_dimension_numbers<[1], [0], [0], [1], [0, 0, 1, 1], [], []>} : vector<8x128xf32>, vector<128x512xf32>, vector<8x512xf32> -> vector<8x512xf32>
    %69 = arith.addf %66, %68 : vector<8x512xf32>
    %70 = vector.extract_strided_slice %69 {offsets = [0, 0], sizes = [8, 384], strides = [1, 1]} : vector<8x512xf32> to vector<8x384xf32>
    %cst_24 = arith.constant 5.000000e-01 : f32
    %71 = vector.broadcast %cst_24 : f32 to vector<8x384xf32>
    %72 = arith.mulf %71, %70 : vector<8x384xf32>
    %73 = math.tanh %72 : vector<8x384xf32>
    %cst_25 = arith.constant 5.000000e-01 : f32
    %74 = vector.broadcast %cst_25 : f32 to vector<8x384xf32>
    %75 = arith.mulf %74, %73 : vector<8x384xf32>
    %cst_26 = arith.constant 5.000000e-01 : f32
    %76 = vector.broadcast %cst_26 : f32 to vector<8x384xf32>
    %77 = arith.addf %75, %76 : vector<8x384xf32>
    %78 = vector.extract_strided_slice %69 {offsets = [0, 384], sizes = [8, 128], strides = [1, 1]} : vector<8x512xf32> to vector<8x128xf32>
    %79 = math.tanh %78 : vector<8x128xf32>
    %80 = vector.extract_strided_slice %77 {offsets = [0, 0], sizes = [8, 128], strides = [1, 1]} : vector<8x384xf32> to vector<8x128xf32>
    %81 = vector.extract_strided_slice %77 {offsets = [0, 128], sizes = [8, 128], strides = [1, 1]} : vector<8x384xf32> to vector<8x128xf32>
    %82 = vector.extract_strided_slice %77 {offsets = [0, 256], sizes = [8, 128], strides = [1, 1]} : vector<8x384xf32> to vector<8x128xf32>
    %83 = arith.mulf %81, %60 : vector<8x128xf32>
    %84 = arith.mulf %80, %79 : vector<8x128xf32>
    %85 = arith.addf %83, %84 : vector<8x128xf32>
    %86 = math.tanh %85 : vector<8x128xf32>
    %87 = arith.mulf %82, %86 : vector<8x128xf32>
    %c3_i32 = arith.constant 3 : i32
    %c8_i32_27 = arith.constant 8 : i32
    %88 = arith.muli %c3_i32, %c8_i32_27 : i32
    %89 = tpu.assume_multiple %88, 8 : i32
    %90 = arith.index_cast %89 : i32 to index
    %c0_28 = arith.constant 0 : index
    %91 = vector.load %arg7[%90, %c0_28] : memref<72x512xf32, #tpu.memory_space<vmem>>, vector<8x512xf32>
    %c0_29 = arith.constant 0 : index
    %c0_30 = arith.constant 0 : index
    %92 = vector.load %arg3[%c0_29, %c0_30] : memref<128x512xf32, #tpu.memory_space<vmem>>, vector<128x512xf32>
    %cst_31 = arith.constant dense<0.000000e+00> : vector<8x512xf32>
    %93 = tpu.matmul %87, %92, %cst_31 {dimension_numbers = #tpu.dot_dimension_numbers<[1], [0], [0], [1], [0, 0, 1, 1], [], []>} : vector<8x128xf32>, vector<128x512xf32>, vector<8x512xf32> -> vector<8x512xf32>
    %94 = arith.addf %91, %93 : vector<8x512xf32>
    %95 = vector.extract_strided_slice %94 {offsets = [0, 0], sizes = [8, 384], strides = [1, 1]} : vector<8x512xf32> to vector<8x384xf32>
    %cst_32 = arith.constant 5.000000e-01 : f32
    %96 = vector.broadcast %cst_32 : f32 to vector<8x384xf32>
    %97 = arith.mulf %96, %95 : vector<8x384xf32>
    %98 = math.tanh %97 : vector<8x384xf32>
    %cst_33 = arith.constant 5.000000e-01 : f32
    %99 = vector.broadcast %cst_33 : f32 to vector<8x384xf32>
    %100 = arith.mulf %99, %98 : vector<8x384xf32>
    %cst_34 = arith.constant 5.000000e-01 : f32
    %101 = vector.broadcast %cst_34 : f32 to vector<8x384xf32>
    %102 = arith.addf %100, %101 : vector<8x384xf32>
    %103 = vector.extract_strided_slice %94 {offsets = [0, 384], sizes = [8, 128], strides = [1, 1]} : vector<8x512xf32> to vector<8x128xf32>
    %104 = math.tanh %103 : vector<8x128xf32>
    %105 = vector.extract_strided_slice %102 {offsets = [0, 0], sizes = [8, 128], strides = [1, 1]} : vector<8x384xf32> to vector<8x128xf32>
    %106 = vector.extract_strided_slice %102 {offsets = [0, 128], sizes = [8, 128], strides = [1, 1]} : vector<8x384xf32> to vector<8x128xf32>
    %107 = vector.extract_strided_slice %102 {offsets = [0, 256], sizes = [8, 128], strides = [1, 1]} : vector<8x384xf32> to vector<8x128xf32>
    %108 = arith.mulf %106, %85 : vector<8x128xf32>
    %109 = arith.mulf %105, %104 : vector<8x128xf32>
    %110 = arith.addf %108, %109 : vector<8x128xf32>
    %111 = math.tanh %110 : vector<8x128xf32>
    %112 = arith.mulf %107, %111 : vector<8x128xf32>
    %c4_i32 = arith.constant 4 : i32
    %c8_i32_35 = arith.constant 8 : i32
    %113 = arith.muli %c4_i32, %c8_i32_35 : i32
    %114 = tpu.assume_multiple %113, 8 : i32
    %115 = arith.index_cast %114 : i32 to index
    %c0_36 = arith.constant 0 : index
    %116 = vector.load %arg7[%115, %c0_36] : memref<72x512xf32, #tpu.memory_space<vmem>>, vector<8x512xf32>
    %c0_37 = arith.constant 0 : index
    %c0_38 = arith.constant 0 : index
    %117 = vector.load %arg3[%c0_37, %c0_38] : memref<128x512xf32, #tpu.memory_space<vmem>>, vector<128x512xf32>
    %cst_39 = arith.constant dense<0.000000e+00> : vector<8x512xf32>
    %118 = tpu.matmul %112, %117, %cst_39 {dimension_numbers = #tpu.dot_dimension_numbers<[1], [0], [0], [1], [0, 0, 1, 1], [], []>} : vector<8x128xf32>, vector<128x512xf32>, vector<8x512xf32> -> vector<8x512xf32>
    %119 = arith.addf %116, %118 : vector<8x512xf32>
    %120 = vector.extract_strided_slice %119 {offsets = [0, 0], sizes = [8, 384], strides = [1, 1]} : vector<8x512xf32> to vector<8x384xf32>
    %cst_40 = arith.constant 5.000000e-01 : f32
    %121 = vector.broadcast %cst_40 : f32 to vector<8x384xf32>
    %122 = arith.mulf %121, %120 : vector<8x384xf32>
    %123 = math.tanh %122 : vector<8x384xf32>
    %cst_41 = arith.constant 5.000000e-01 : f32
    %124 = vector.broadcast %cst_41 : f32 to vector<8x384xf32>
    %125 = arith.mulf %124, %123 : vector<8x384xf32>
    %cst_42 = arith.constant 5.000000e-01 : f32
    %126 = vector.broadcast %cst_42 : f32 to vector<8x384xf32>
    %127 = arith.addf %125, %126 : vector<8x384xf32>
    %128 = vector.extract_strided_slice %119 {offsets = [0, 384], sizes = [8, 128], strides = [1, 1]} : vector<8x512xf32> to vector<8x128xf32>
    %129 = math.tanh %128 : vector<8x128xf32>
    %130 = vector.extract_strided_slice %127 {offsets = [0, 0], sizes = [8, 128], strides = [1, 1]} : vector<8x384xf32> to vector<8x128xf32>
    %131 = vector.extract_strided_slice %127 {offsets = [0, 128], sizes = [8, 128], strides = [1, 1]} : vector<8x384xf32> to vector<8x128xf32>
    %132 = vector.extract_strided_slice %127 {offsets = [0, 256], sizes = [8, 128], strides = [1, 1]} : vector<8x384xf32> to vector<8x128xf32>
    %133 = arith.mulf %131, %110 : vector<8x128xf32>
    %134 = arith.mulf %130, %129 : vector<8x128xf32>
    %135 = arith.addf %133, %134 : vector<8x128xf32>
    %136 = math.tanh %135 : vector<8x128xf32>
    %137 = arith.mulf %132, %136 : vector<8x128xf32>
    %c5_i32 = arith.constant 5 : i32
    %c8_i32_43 = arith.constant 8 : i32
    %138 = arith.muli %c5_i32, %c8_i32_43 : i32
    %139 = tpu.assume_multiple %138, 8 : i32
    %140 = arith.index_cast %139 : i32 to index
    %c0_44 = arith.constant 0 : index
    %141 = vector.load %arg7[%140, %c0_44] : memref<72x512xf32, #tpu.memory_space<vmem>>, vector<8x512xf32>
    %c0_45 = arith.constant 0 : index
    %c0_46 = arith.constant 0 : index
    %142 = vector.load %arg3[%c0_45, %c0_46] : memref<128x512xf32, #tpu.memory_space<vmem>>, vector<128x512xf32>
    %cst_47 = arith.constant dense<0.000000e+00> : vector<8x512xf32>
    %143 = tpu.matmul %137, %142, %cst_47 {dimension_numbers = #tpu.dot_dimension_numbers<[1], [0], [0], [1], [0, 0, 1, 1], [], []>} : vector<8x128xf32>, vector<128x512xf32>, vector<8x512xf32> -> vector<8x512xf32>
    %144 = arith.addf %141, %143 : vector<8x512xf32>
    %145 = vector.extract_strided_slice %144 {offsets = [0, 0], sizes = [8, 384], strides = [1, 1]} : vector<8x512xf32> to vector<8x384xf32>
    %cst_48 = arith.constant 5.000000e-01 : f32
    %146 = vector.broadcast %cst_48 : f32 to vector<8x384xf32>
    %147 = arith.mulf %146, %145 : vector<8x384xf32>
    %148 = math.tanh %147 : vector<8x384xf32>
    %cst_49 = arith.constant 5.000000e-01 : f32
    %149 = vector.broadcast %cst_49 : f32 to vector<8x384xf32>
    %150 = arith.mulf %149, %148 : vector<8x384xf32>
    %cst_50 = arith.constant 5.000000e-01 : f32
    %151 = vector.broadcast %cst_50 : f32 to vector<8x384xf32>
    %152 = arith.addf %150, %151 : vector<8x384xf32>
    %153 = vector.extract_strided_slice %144 {offsets = [0, 384], sizes = [8, 128], strides = [1, 1]} : vector<8x512xf32> to vector<8x128xf32>
    %154 = math.tanh %153 : vector<8x128xf32>
    %155 = vector.extract_strided_slice %152 {offsets = [0, 0], sizes = [8, 128], strides = [1, 1]} : vector<8x384xf32> to vector<8x128xf32>
    %156 = vector.extract_strided_slice %152 {offsets = [0, 128], sizes = [8, 128], strides = [1, 1]} : vector<8x384xf32> to vector<8x128xf32>
    %157 = vector.extract_strided_slice %152 {offsets = [0, 256], sizes = [8, 128], strides = [1, 1]} : vector<8x384xf32> to vector<8x128xf32>
    %158 = arith.mulf %156, %135 : vector<8x128xf32>
    %159 = arith.mulf %155, %154 : vector<8x128xf32>
    %160 = arith.addf %158, %159 : vector<8x128xf32>
    %161 = math.tanh %160 : vector<8x128xf32>
    %162 = arith.mulf %157, %161 : vector<8x128xf32>
    %c6_i32 = arith.constant 6 : i32
    %c8_i32_51 = arith.constant 8 : i32
    %163 = arith.muli %c6_i32, %c8_i32_51 : i32
    %164 = tpu.assume_multiple %163, 8 : i32
    %165 = arith.index_cast %164 : i32 to index
    %c0_52 = arith.constant 0 : index
    %166 = vector.load %arg7[%165, %c0_52] : memref<72x512xf32, #tpu.memory_space<vmem>>, vector<8x512xf32>
    %c0_53 = arith.constant 0 : index
    %c0_54 = arith.constant 0 : index
    %167 = vector.load %arg3[%c0_53, %c0_54] : memref<128x512xf32, #tpu.memory_space<vmem>>, vector<128x512xf32>
    %cst_55 = arith.constant dense<0.000000e+00> : vector<8x512xf32>
    %168 = tpu.matmul %162, %167, %cst_55 {dimension_numbers = #tpu.dot_dimension_numbers<[1], [0], [0], [1], [0, 0, 1, 1], [], []>} : vector<8x128xf32>, vector<128x512xf32>, vector<8x512xf32> -> vector<8x512xf32>
    %169 = arith.addf %166, %168 : vector<8x512xf32>
    %170 = vector.extract_strided_slice %169 {offsets = [0, 0], sizes = [8, 384], strides = [1, 1]} : vector<8x512xf32> to vector<8x384xf32>
    %cst_56 = arith.constant 5.000000e-01 : f32
    %171 = vector.broadcast %cst_56 : f32 to vector<8x384xf32>
    %172 = arith.mulf %171, %170 : vector<8x384xf32>
    %173 = math.tanh %172 : vector<8x384xf32>
    %cst_57 = arith.constant 5.000000e-01 : f32
    %174 = vector.broadcast %cst_57 : f32 to vector<8x384xf32>
    %175 = arith.mulf %174, %173 : vector<8x384xf32>
    %cst_58 = arith.constant 5.000000e-01 : f32
    %176 = vector.broadcast %cst_58 : f32 to vector<8x384xf32>
    %177 = arith.addf %175, %176 : vector<8x384xf32>
    %178 = vector.extract_strided_slice %169 {offsets = [0, 384], sizes = [8, 128], strides = [1, 1]} : vector<8x512xf32> to vector<8x128xf32>
    %179 = math.tanh %178 : vector<8x128xf32>
    %180 = vector.extract_strided_slice %177 {offsets = [0, 0], sizes = [8, 128], strides = [1, 1]} : vector<8x384xf32> to vector<8x128xf32>
    %181 = vector.extract_strided_slice %177 {offsets = [0, 128], sizes = [8, 128], strides = [1, 1]} : vector<8x384xf32> to vector<8x128xf32>
    %182 = vector.extract_strided_slice %177 {offsets = [0, 256], sizes = [8, 128], strides = [1, 1]} : vector<8x384xf32> to vector<8x128xf32>
    %183 = arith.mulf %181, %160 : vector<8x128xf32>
    %184 = arith.mulf %180, %179 : vector<8x128xf32>
    %185 = arith.addf %183, %184 : vector<8x128xf32>
    %186 = math.tanh %185 : vector<8x128xf32>
    %187 = arith.mulf %182, %186 : vector<8x128xf32>
    %c7_i32 = arith.constant 7 : i32
    %c8_i32_59 = arith.constant 8 : i32
    %188 = arith.muli %c7_i32, %c8_i32_59 : i32
    %189 = tpu.assume_multiple %188, 8 : i32
    %190 = arith.index_cast %189 : i32 to index
    %c0_60 = arith.constant 0 : index
    %191 = vector.load %arg7[%190, %c0_60] : memref<72x512xf32, #tpu.memory_space<vmem>>, vector<8x512xf32>
    %c0_61 = arith.constant 0 : index
    %c0_62 = arith.constant 0 : index
    %192 = vector.load %arg3[%c0_61, %c0_62] : memref<128x512xf32, #tpu.memory_space<vmem>>, vector<128x512xf32>
    %cst_63 = arith.constant dense<0.000000e+00> : vector<8x512xf32>
    %193 = tpu.matmul %187, %192, %cst_63 {dimension_numbers = #tpu.dot_dimension_numbers<[1], [0], [0], [1], [0, 0, 1, 1], [], []>} : vector<8x128xf32>, vector<128x512xf32>, vector<8x512xf32> -> vector<8x512xf32>
    %194 = arith.addf %191, %193 : vector<8x512xf32>
    %195 = vector.extract_strided_slice %194 {offsets = [0, 0], sizes = [8, 384], strides = [1, 1]} : vector<8x512xf32> to vector<8x384xf32>
    %cst_64 = arith.constant 5.000000e-01 : f32
    %196 = vector.broadcast %cst_64 : f32 to vector<8x384xf32>
    %197 = arith.mulf %196, %195 : vector<8x384xf32>
    %198 = math.tanh %197 : vector<8x384xf32>
    %cst_65 = arith.constant 5.000000e-01 : f32
    %199 = vector.broadcast %cst_65 : f32 to vector<8x384xf32>
    %200 = arith.mulf %199, %198 : vector<8x384xf32>
    %cst_66 = arith.constant 5.000000e-01 : f32
    %201 = vector.broadcast %cst_66 : f32 to vector<8x384xf32>
    %202 = arith.addf %200, %201 : vector<8x384xf32>
    %203 = vector.extract_strided_slice %194 {offsets = [0, 384], sizes = [8, 128], strides = [1, 1]} : vector<8x512xf32> to vector<8x128xf32>
    %204 = math.tanh %203 : vector<8x128xf32>
    %205 = vector.extract_strided_slice %202 {offsets = [0, 0], sizes = [8, 128], strides = [1, 1]} : vector<8x384xf32> to vector<8x128xf32>
    %206 = vector.extract_strided_slice %202 {offsets = [0, 128], sizes = [8, 128], strides = [1, 1]} : vector<8x384xf32> to vector<8x128xf32>
    %207 = vector.extract_strided_slice %202 {offsets = [0, 256], sizes = [8, 128], strides = [1, 1]} : vector<8x384xf32> to vector<8x128xf32>
    %208 = arith.mulf %206, %185 : vector<8x128xf32>
    %209 = arith.mulf %205, %204 : vector<8x128xf32>
    %210 = arith.addf %208, %209 : vector<8x128xf32>
    %211 = math.tanh %210 : vector<8x128xf32>
    %212 = arith.mulf %207, %211 : vector<8x128xf32>
    %c8_i32_67 = arith.constant 8 : i32
    %c8_i32_68 = arith.constant 8 : i32
    %213 = arith.muli %c8_i32_67, %c8_i32_68 : i32
    %214 = tpu.assume_multiple %213, 8 : i32
    %215 = arith.index_cast %214 : i32 to index
    %c0_69 = arith.constant 0 : index
    %216 = vector.load %arg7[%215, %c0_69] : memref<72x512xf32, #tpu.memory_space<vmem>>, vector<8x512xf32>
    %c0_70 = arith.constant 0 : index
    %c0_71 = arith.constant 0 : index
    %217 = vector.load %arg3[%c0_70, %c0_71] : memref<128x512xf32, #tpu.memory_space<vmem>>, vector<128x512xf32>
    %cst_72 = arith.constant dense<0.000000e+00> : vector<8x512xf32>
    %218 = tpu.matmul %212, %217, %cst_72 {dimension_numbers = #tpu.dot_dimension_numbers<[1], [0], [0], [1], [0, 0, 1, 1], [], []>} : vector<8x128xf32>, vector<128x512xf32>, vector<8x512xf32> -> vector<8x512xf32>
    %219 = arith.addf %216, %218 : vector<8x512xf32>
    %220 = vector.extract_strided_slice %219 {offsets = [0, 0], sizes = [8, 384], strides = [1, 1]} : vector<8x512xf32> to vector<8x384xf32>
    %cst_73 = arith.constant 5.000000e-01 : f32
    %221 = vector.broadcast %cst_73 : f32 to vector<8x384xf32>
    %222 = arith.mulf %221, %220 : vector<8x384xf32>
    %223 = math.tanh %222 : vector<8x384xf32>
    %cst_74 = arith.constant 5.000000e-01 : f32
    %224 = vector.broadcast %cst_74 : f32 to vector<8x384xf32>
    %225 = arith.mulf %224, %223 : vector<8x384xf32>
    %cst_75 = arith.constant 5.000000e-01 : f32
    %226 = vector.broadcast %cst_75 : f32 to vector<8x384xf32>
    %227 = arith.addf %225, %226 : vector<8x384xf32>
    %228 = vector.extract_strided_slice %219 {offsets = [0, 384], sizes = [8, 128], strides = [1, 1]} : vector<8x512xf32> to vector<8x128xf32>
    %229 = math.tanh %228 : vector<8x128xf32>
    %230 = vector.extract_strided_slice %227 {offsets = [0, 0], sizes = [8, 128], strides = [1, 1]} : vector<8x384xf32> to vector<8x128xf32>
    %231 = vector.extract_strided_slice %227 {offsets = [0, 128], sizes = [8, 128], strides = [1, 1]} : vector<8x384xf32> to vector<8x128xf32>
    %232 = vector.extract_strided_slice %227 {offsets = [0, 256], sizes = [8, 128], strides = [1, 1]} : vector<8x384xf32> to vector<8x128xf32>
    %233 = arith.mulf %231, %210 : vector<8x128xf32>
    %234 = arith.mulf %230, %229 : vector<8x128xf32>
    %235 = arith.addf %233, %234 : vector<8x128xf32>
    %236 = math.tanh %235 : vector<8x128xf32>
    %237 = arith.mulf %232, %236 : vector<8x128xf32>
    %c8_i32_76 = arith.constant 8 : i32
    %c0_77 = arith.constant 0 : index
    %c0_78 = arith.constant 0 : index
    %238 = vector.load %arg4[%c0_77, %c0_78] : memref<128x128xf32, #tpu.memory_space<vmem>>, vector<128x128xf32>
    %cst_79 = arith.constant dense<0.000000e+00> : vector<8x128xf32>
    %239 = tpu.matmul %237, %238, %cst_79 {dimension_numbers = #tpu.dot_dimension_numbers<[1], [0], [0], [1], [0, 0, 1, 1], [], []>} : vector<8x128xf32>, vector<128x128xf32>, vector<8x128xf32> -> vector<8x128xf32>
    %c0_80 = arith.constant 0 : index
    %c0_81 = arith.constant 0 : index
    %240 = vector.load %arg5[%c0_80, %c0_81] : memref<1x128xf32, #tpu.memory_space<vmem>>, vector<1x128xf32>
    %241 = vector.broadcast %240 : vector<1x128xf32> to vector<8x128xf32>
    %242 = arith.addf %239, %241 : vector<8x128xf32>
    %c0_82 = arith.constant 0 : index
    %c0_83 = arith.constant 0 : index
    %243 = vector.load %arg6[%c0_82, %c0_83] : memref<8x128xf32, #tpu.memory_space<vmem>>, vector<8x128xf32>
    tpu.vector_store %arg6[%c0_82, %c0_83], %242 {strides = array<i32>} : memref<8x128xf32, #tpu.memory_space<vmem>>, vector<8x128xf32>,
    return
  }
}

</mosaic_0001>

<llo_original>
// kernel: lstm_model_forward.1
$region0: #{lstm_model_forward.1}
  #allocation0 [shape = 'u32[]', space=smem, size = 0x4, offset = 0x4, fixed_abs, tag = 'smem constant byte address 0x4 - core index']
  #allocation1 [shape = 'u32[72,128]{1,0:T(1,128)}', space=vmem, size = 0x9000, scoped, tag = 'internal scratch']
  #allocation2 [shape = 'f32[72,512]{1,0:T(8,128)}', space=vmem, size = 0x24000, scoped, tag = 'scratch operand']
  %s0 = inlined_call_operand.vmem [shape: f32[72,1], index: 0, kind: input, shape index: {}]
  %s1 = inlined_call_operand.vmem [shape: f32[1,512], index: 1, kind: input, shape index: {}]
  %s2 = inlined_call_operand.vmem [shape: f32[1,512], index: 2, kind: input, shape index: {}]
  %s3 = inlined_call_operand.hbm [shape: f32[128,512], index: 3, kind: input, shape index: {}]
  %s4 = inlined_call_operand.hbm [shape: f32[128,128], index: 4, kind: input, shape index: {}]
  %s5 = inlined_call_operand.vmem [shape: f32[1,128], index: 5, kind: input, shape index: {}]
  %s6 = inlined_call_operand.vmem [shape: f32[8,128], index: 6, kind: output, shape index: {}]
  %s7 = sld [smem:[#allocation0]]
  $region42: #{lstm_model_forward.1} parent=0
    _
  %s9 = ssub.s32 1, %s7
  %s10 = scalar_select 0, %s9, %s7
  $region1: #{lstm_model_forward.1} parent=0
    #allocation3 [shape = 'u8[262144]{0}', space=vmem, size = 0x40000, scoped, tag = 'input window, operand 3, single buffered']
    #allocation4 [shape = 's32[1]{0}', space=sflag, size = 0x4, scoped, tag = 'scoped memory for lstm_model_forward.1']
    #allocation5 [shape = 'u8[65536]{0}', space=vmem, size = 0x10000, scoped, tag = 'input window, operand 4, single buffered']
    #allocation6 [shape = 's32[1]{0}', space=sflag, size = 0x4, scoped, tag = 'scoped memory for lstm_model_forward.1']
    %11 = vsyncpa [#allocation4], 0
    %12 = vsyncpa [#allocation6], 0
    // Predicated region
    $region2: #{lstm_model_forward.1} parent=1 // pred_check
      _
    $region3: #{lstm_model_forward.1} parent=1 // pred_check_branch
      %14 = sbr.rel (0) target = $region5
    $region4: #{lstm_model_forward.1} parent=1 // pred_region
      _
    $region5: #{lstm_model_forward.1} parent=1 // pred_fallthru
      _
    // Predicated region
    $region6: #{lstm_model_forward.1} parent=1 // pred_check
      _
    $region7: #{lstm_model_forward.1} parent=1 // pred_check_branch
      %16 = sbr.rel (0) target = $region9
    $region8: #{lstm_model_forward.1} parent=1 // pred_region
      _
    $region9: #{lstm_model_forward.1} parent=1 // pred_fallthru
      _
    // Predicated region
    $region10: #{lstm_model_forward.1} parent=1 // pred_check
      _
    $region11: #{lstm_model_forward.1} parent=1 // pred_check_branch
      %18 = sbr.rel (0) target = $region13
    $region12: #{lstm_model_forward.1} parent=1 // pred_region
      _
    $region13: #{lstm_model_forward.1} parent=1 // pred_fallthru
      _
    // Predicated region
    $region14: #{lstm_model_forward.1} parent=1 // pred_check
      _
    $region15: #{lstm_model_forward.1} parent=1 // pred_check_branch
      %20 = sbr.rel (0) target = $region17
    $region16: #{lstm_model_forward.1} parent=1 // pred_region
      %22 = vsyncadd [#allocation4], 0
      %s23 = sshll.u32 %s3, 4
      %s24 = int_to_ptr.hbm [resolvable:$true] %s23
      %s25 = sshll.u32 [#allocation3], 4
      %s26 = int_to_ptr.vmem [resolvable:$true] %s25
      %31 = dma.hbm_to_vmem [thread:$0]  %s24, 8192, %s26, [#allocation4], 512, 512, 32
    $region17: #{lstm_model_forward.1} parent=1 // pred_fallthru
      _
    // Predicated region
    $region18: #{lstm_model_forward.1} parent=1 // pred_check
      _
    $region19: #{lstm_model_forward.1} parent=1 // pred_check_branch
      %33 = sbr.rel (0) target = $region21
    $region20: #{lstm_model_forward.1} parent=1 // pred_region
      %35 = vsyncadd [#allocation6], 0
      %s36 = sshll.u32 %s4, 4
      %s37 = int_to_ptr.hbm [resolvable:$true] %s36
      %s38 = sshll.u32 [#allocation5], 4
      %s39 = int_to_ptr.vmem [resolvable:$true] %s38
      %44 = dma.hbm_to_vmem [thread:$0]  %s37, 2048, %s39, [#allocation6], 128, 128, 8
    $region21: #{lstm_model_forward.1} parent=1 // pred_fallthru
      _
    // Predicated region
    $region22: #{lstm_model_forward.1} parent=1 // pred_check
      _
    $region23: #{lstm_model_forward.1} parent=1 // pred_check_branch
      %46 = sbr.rel (0) target = $region25
    $region24: #{lstm_model_forward.1} parent=1 // pred_region
      _
    $region25: #{lstm_model_forward.1} parent=1 // pred_fallthru
      _
    // Predicated region
    $region26: #{lstm_model_forward.1} parent=1 // pred_check
      _
    $region27: #{lstm_model_forward.1} parent=1 // pred_check_branch
      %48 = sbr.rel (0) target = $region29
    $region28: #{lstm_model_forward.1} parent=1 // pred_region
      %50 = dma.done [#allocation4], 8192
    $region29: #{lstm_model_forward.1} parent=1 // pred_fallthru
      _
    // Predicated region
    $region30: #{lstm_model_forward.1} parent=1 // pred_check
      _
    $region31: #{lstm_model_forward.1} parent=1 // pred_check_branch
      %52 = sbr.rel (0) target = $region33
    $region32: #{lstm_model_forward.1} parent=1 // pred_region
      %54 = dma.done [#allocation6], 2048
    $region33: #{lstm_model_forward.1} parent=1 // pred_fallthru
      _
    %v55 = vld [vmem:[%s0] sm:$0xff]
    %v56 = vld [vmem:[%s0 + $0x8] sm:$0xff]
    %v57 = vld [vmem:[%s0 + $0x10] sm:$0xff]
    %v58 = vld [vmem:[%s0 + $0x18] sm:$0xff]
    %v59 = vld [vmem:[%s0 + $0x20] sm:$0xff]
    %v60 = vld [vmem:[%s0 + $0x28] sm:$0xff]
    %v61 = vld [vmem:[%s0 + $0x30] sm:$0xff]
    %v62 = vld [vmem:[%s0 + $0x38] sm:$0xff]
    %v63 = vld [vmem:[%s0 + $0x40] sm:$0xff]
    %v64 = vld [vmem:[%s1] sm:$0xf]
    %66 = vset.pattern.permute.xlu0 0
    %67 = vperm.xlu0 %66, %v55
    %v68 = vpop.permute.xlu0 %67
    %71 = vset.pattern.permute.xlu0 0
    %72 = vperm.xlu0 %71, %v56
    %v73 = vpop.permute.xlu0 %72
    %76 = vset.pattern.permute.xlu0 0
    %77 = vperm.xlu0 %76, %v57
    %v78 = vpop.permute.xlu0 %77
    %81 = vset.pattern.permute.xlu0 0
    %82 = vperm.xlu0 %81, %v58
    %v83 = vpop.permute.xlu0 %82
    %86 = vset.pattern.permute.xlu0 0
    %87 = vperm.xlu0 %86, %v59
    %v88 = vpop.permute.xlu0 %87
    %91 = vset.pattern.permute.xlu0 0
    %92 = vperm.xlu0 %91, %v60
    %v93 = vpop.permute.xlu0 %92
    %96 = vset.pattern.permute.xlu0 0
    %97 = vperm.xlu0 %96, %v61
    %v98 = vpop.permute.xlu0 %97
    %101 = vset.pattern.permute.xlu0 0
    %102 = vperm.xlu0 %101, %v62
    %v103 = vpop.permute.xlu0 %102
    %106 = vset.pattern.permute.xlu0 0
    %107 = vperm.xlu0 %106, %v63
    %v108 = vpop.permute.xlu0 %107
    %v111 = vperm.slane %v64, 0
    %v112 = vperm.slane %v64, 1
    %v113 = vperm.slane %v64, 2
    %v114 = vperm.slane %v64, 3
    %v119 = vmul.f32 %v68, %v111
    %v120 = vmul.f32 %v68, %v112
    %v121 = vmul.f32 %v68, %v113
    %v122 = vmul.f32 %v68, %v114
    %v123 = vmul.f32 %v73, %v111
    %v124 = vmul.f32 %v73, %v112
    %v125 = vmul.f32 %v73, %v113
    %v126 = vmul.f32 %v73, %v114
    %v127 = vmul.f32 %v78, %v111
    %v128 = vmul.f32 %v78, %v112
    %v129 = vmul.f32 %v78, %v113
    %v130 = vmul.f32 %v78, %v114
    %v131 = vmul.f32 %v83, %v111
    %v132 = vmul.f32 %v83, %v112
    %v133 = vmul.f32 %v83, %v113
    %v134 = vmul.f32 %v83, %v114
    %v135 = vmul.f32 %v88, %v111
    %v136 = vmul.f32 %v88, %v112
    %v137 = vmul.f32 %v88, %v113
    %v138 = vmul.f32 %v88, %v114
    %v139 = vmul.f32 %v93, %v111
    %v140 = vmul.f32 %v93, %v112
    %v141 = vmul.f32 %v93, %v113
    %v142 = vmul.f32 %v93, %v114
    %v143 = vmul.f32 %v98, %v111
    %v144 = vmul.f32 %v98, %v112
    %v145 = vmul.f32 %v98, %v113
    %v146 = vmul.f32 %v98, %v114
    %v147 = vmul.f32 %v103, %v111
    %v148 = vmul.f32 %v103, %v112
    %v149 = vmul.f32 %v103, %v113
    %v150 = vmul.f32 %v103, %v114
    %v151 = vmul.f32 %v108, %v111
    %v152 = vmul.f32 %v108, %v112
    %v153 = vmul.f32 %v108, %v113
    %v154 = vmul.f32 %v108, %v114
    %v155 = vld [vmem:[%s2] sm:$0xf]
    %v157 = vperm.slane %v155, 0
    %v158 = vperm.slane %v155, 1
    %v159 = vperm.slane %v155, 2
    %v160 = vperm.slane %v155, 3
    %v165 = vadd.f32 %v119, %v157
    %v166 = vadd.f32 %v120, %v158
    %v167 = vadd.f32 %v121, %v159
    %v168 = vadd.f32 %v122, %v160
    %v169 = vadd.f32 %v123, %v157
    %v170 = vadd.f32 %v124, %v158
    %v171 = vadd.f32 %v125, %v159
    %v172 = vadd.f32 %v126, %v160
    %v173 = vadd.f32 %v127, %v157
    %v174 = vadd.f32 %v128, %v158
    %v175 = vadd.f32 %v129, %v159
    %v176 = vadd.f32 %v130, %v160
    %v177 = vadd.f32 %v131, %v157
    %v178 = vadd.f32 %v132, %v158
    %v179 = vadd.f32 %v133, %v159
    %v180 = vadd.f32 %v134, %v160
    %v181 = vadd.f32 %v135, %v157
    %v182 = vadd.f32 %v136, %v158
    %v183 = vadd.f32 %v137, %v159
    %v184 = vadd.f32 %v138, %v160
    %v185 = vadd.f32 %v139, %v157
    %v186 = vadd.f32 %v140, %v158
    %v187 = vadd.f32 %v141, %v159
    %v188 = vadd.f32 %v142, %v160
    %v189 = vadd.f32 %v143, %v157
    %v190 = vadd.f32 %v144, %v158
    %v191 = vadd.f32 %v145, %v159
    %v192 = vadd.f32 %v146, %v160
    %v193 = vadd.f32 %v147, %v157
    %v194 = vadd.f32 %v148, %v158
    %v195 = vadd.f32 %v149, %v159
    %v196 = vadd.f32 %v150, %v160
    %v197 = vadd.f32 %v151, %v157
    %v198 = vadd.f32 %v152, %v158
    %v199 = vadd.f32 %v153, %v159
    %v200 = vadd.f32 %v154, %v160
    %201 = vst [vmem:[#allocation2] sm:$0xff] %v165
    %202 = vst [vmem:[#allocation2 + $0x8] sm:$0xff] %v166
    %203 = vst [vmem:[#allocation2 + $0x10] sm:$0xff] %v167
    %204 = vst [vmem:[#allocation2 + $0x18] sm:$0xff] %v168
    %205 = vst [vmem:[#allocation2 + $0x20] sm:$0xff] %v169
    %206 = vst [vmem:[#allocation2 + $0x28] sm:$0xff] %v170
    %207 = vst [vmem:[#allocation2 + $0x30] sm:$0xff] %v171
    %208 = vst [vmem:[#allocation2 + $0x38] sm:$0xff] %v172
    %209 = vst [vmem:[#allocation2 + $0x40] sm:$0xff] %v173
    %210 = vst [vmem:[#allocation2 + $0x48] sm:$0xff] %v174
    %211 = vst [vmem:[#allocation2 + $0x50] sm:$0xff] %v175
    %212 = vst [vmem:[#allocation2 + $0x58] sm:$0xff] %v176
    %213 = vst [vmem:[#allocation2 + $0x60] sm:$0xff] %v177
    %214 = vst [vmem:[#allocation2 + $0x68] sm:$0xff] %v178
    %215 = vst [vmem:[#allocation2 + $0x70] sm:$0xff] %v179
    %216 = vst [vmem:[#allocation2 + $0x78] sm:$0xff] %v180
    %217 = vst [vmem:[#allocation2 + $0x80] sm:$0xff] %v181
    %218 = vst [vmem:[#allocation2 + $0x88] sm:$0xff] %v182
    %219 = vst [vmem:[#allocation2 + $0x90] sm:$0xff] %v183
    %220 = vst [vmem:[#allocation2 + $0x98] sm:$0xff] %v184
    %221 = vst [vmem:[#allocation2 + $0xa0] sm:$0xff] %v185
    %222 = vst [vmem:[#allocation2 + $0xa8] sm:$0xff] %v186
    %223 = vst [vmem:[#allocation2 + $0xb0] sm:$0xff] %v187
    %224 = vst [vmem:[#allocation2 + $0xb8] sm:$0xff] %v188
    %225 = vst [vmem:[#allocation2 + $0xc0] sm:$0xff] %v189
    %226 = vst [vmem:[#allocation2 + $0xc8] sm:$0xff] %v190
    %227 = vst [vmem:[#allocation2 + $0xd0] sm:$0xff] %v191
    %228 = vst [vmem:[#allocation2 + $0xd8] sm:$0xff] %v192
    %229 = vst [vmem:[#allocation2 + $0xe0] sm:$0xff] %v193
    %230 = vst [vmem:[#allocation2 + $0xe8] sm:$0xff] %v194
    %231 = vst [vmem:[#allocation2 + $0xf0] sm:$0xff] %v195
    %232 = vst [vmem:[#allocation2 + $0xf8] sm:$0xff] %v196
    %233 = vst [vmem:[#allocation2 + $0x100] sm:$0xff] %v197
    %234 = vst [vmem:[#allocation2 + $0x108] sm:$0xff] %v198
    %235 = vst [vmem:[#allocation2 + $0x110] sm:$0xff] %v199
    %236 = vst [vmem:[#allocation2 + $0x118] sm:$0xff] %v200
    %v237 = vld [vmem:[#allocation2] sm:$0xff]
    %v238 = vld [vmem:[#allocation2 + $0x8] sm:$0xff]
    %v239 = vld [vmem:[#allocation2 + $0x10] sm:$0xff]
    %v240 = vld [vmem:[#allocation2 + $0x18] sm:$0xff]
    %v241 = vmul.f32 %v237, 0.5
    %v242 = vmul.f32 %v238, 0.5
    %v243 = vmul.f32 %v239, 0.5
    %v244 = vtanh.pop %v241
    %v245 = vtanh.pop %v242
    %v246 = vtanh.pop %v243
    %v247 = vmul.f32 %v244, 0.5
    %v248 = vmul.f32 %v245, 0.5
    %v249 = vmul.f32 %v246, 0.5
    %v250 = vadd.f32 %v247, 0.5
    %v251 = vadd.f32 %v248, 0.5
    %v252 = vadd.f32 %v249, 0.5
    %v253 = vtanh.pop %v240
    %v254 = vmul.f32 %v251, 0.0
    %v255 = vmul.f32 %v250, %v253
    %v256 = vadd.f32 %v254, %v255
    %v257 = vtanh.pop %v256
    %v258 = vmul.f32 %v252, %v257
    %v259 = vlaneseq
    %v260 = vand.u32 %v259, 127
    %vm261 = vcmp.lt.s32.totalorder %v260, 64
    %v262 = vsel %vm261, 1, 0
    %v263 = vcvt.s32.f32 %v262
    %v264 = vmul.f32 %v258, %v263
    %v265 = vmul.f32 %v256, %v263
    %s266 = smul.u32 1, 4
    %s267 = smul.addr %s266, 8
    %s268 = scalar_lea.vmem [#allocation2], %s267
    %v269 = vld [vmem:[%s268] sm:$0xff]
    %v270 = vld [vmem:[%s268 + $0x8] sm:$0xff]
    %v271 = vld [vmem:[%s268 + $0x10] sm:$0xff]
    %v272 = vld [vmem:[%s268 + $0x18] sm:$0xff]
    %v273 = vld [vmem:[#allocation3] sm:$0xff]
    %v274 = vld [vmem:[#allocation3 + $0x8] sm:$0xff]
    %v275 = vld [vmem:[#allocation3 + $0x10] sm:$0xff]
    %v276 = vld [vmem:[#allocation3 + $0x18] sm:$0xff]
    %v277 = vld [vmem:[#allocation3 + $0x20] sm:$0xff]
    %v278 = vld [vmem:[#allocation3 + $0x28] sm:$0xff]
    %v279 = vld [vmem:[#allocation3 + $0x30] sm:$0xff]
    %v280 = vld [vmem:[#allocation3 + $0x38] sm:$0xff]
    %v281 = vld [vmem:[#allocation3 + $0x40] sm:$0xff]
    %v282 = vld [vmem:[#allocation3 + $0x48] sm:$0xff]
    %v283 = vld [vmem:[#allocation3 + $0x50] sm:$0xff]
    %v284 = vld [vmem:[#allocation3 + $0x58] sm:$0xff]
    %v285 = vld [vmem:[#allocation3 + $0x60] sm:$0xff]
    %v286 = vld [vmem:[#allocation3 + $0x68] sm:$0xff]
    %v287 = vld [vmem:[#allocation3 + $0x70] sm:$0xff]
    %v288 = vld [vmem:[#allocation3 + $0x78] sm:$0xff]
    %v289 = vld [vmem:[#allocation3 + $0x80] sm:$0xff]
    %v290 = vld [vmem:[#allocation3 + $0x88] sm:$0xff]
    %v291 = vld [vmem:[#allocation3 + $0x90] sm:$0xff]
    %v292 = vld [vmem:[#allocation3 + $0x98] sm:$0xff]
    %v293 = vld [vmem:[#allocation3 + $0xa0] sm:$0xff]
    %v294 = vld [vmem:[#allocation3 + $0xa8] sm:$0xff]
    %v295 = vld [vmem:[#allocation3 + $0xb0] sm:$0xff]
    %v296 = vld [vmem:[#allocation3 + $0xb8] sm:$0xff]
    %v297 = vld [vmem:[#allocation3 + $0xc0] sm:$0xff]
    %v298 = vld [vmem:[#allocation3 + $0xc8] sm:$0xff]
    %v299 = vld [vmem:[#allocation3 + $0xd0] sm:$0xff]
    %v300 = vld [vmem:[#allocation3 + $0xd8] sm:$0xff]
    %v301 = vld [vmem:[#allocation3 + $0xe0] sm:$0xff]
    %v302 = vld [vmem:[#allocation3 + $0xe8] sm:$0xff]
    %v303 = vld [vmem:[#allocation3 + $0xf0] sm:$0xff]
    %v304 = vld [vmem:[#allocation3 + $0xf8] sm:$0xff]
    %v305 = vld [vmem:[#allocation3 + $0x100] sm:$0xff]
    %v306 = vld [vmem:[#allocation3 + $0x108] sm:$0xff]
    %v307 = vld [vmem:[#allocation3 + $0x110] sm:$0xff]
    %v308 = vld [vmem:[#allocation3 + $0x118] sm:$0xff]
    %v309 = vld [vmem:[#allocation3 + $0x120] sm:$0xff]
    %v310 = vld [vmem:[#allocation3 + $0x128] sm:$0xff]
    %v311 = vld [vmem:[#allocation3 + $0x130] sm:$0xff]
    %v312 = vld [vmem:[#allocation3 + $0x138] sm:$0xff]
    %v313 = vld [vmem:[#allocation3 + $0x140] sm:$0xff]
    %v314 = vld [vmem:[#allocation3 + $0x148] sm:$0xff]
    %v315 = vld [vmem:[#allocation3 + $0x150] sm:$0xff]
    %v316 = vld [vmem:[#allocation3 + $0x158] sm:$0xff]
    %v317 = vld [vmem:[#allocation3 + $0x160] sm:$0xff]
    %v318 = vld [vmem:[#allocation3 + $0x168] sm:$0xff]
    %v319 = vld [vmem:[#allocation3 + $0x170] sm:$0xff]
    %v320 = vld [vmem:[#allocation3 + $0x178] sm:$0xff]
    %v321 = vld [vmem:[#allocation3 + $0x180] sm:$0xff]
    %v322 = vld [vmem:[#allocation3 + $0x188] sm:$0xff]
    %v323 = vld [vmem:[#allocation3 + $0x190] sm:$0xff]
    %v324 = vld [vmem:[#allocation3 + $0x198] sm:$0xff]
    %v325 = vld [vmem:[#allocation3 + $0x1a0] sm:$0xff]
    %v326 = vld [vmem:[#allocation3 + $0x1a8] sm:$0xff]
    %v327 = vld [vmem:[#allocation3 + $0x1b0] sm:$0xff]
    %v328 = vld [vmem:[#allocation3 + $0x1b8] sm:$0xff]
    %v329 = vld [vmem:[#allocation3 + $0x1c0] sm:$0xff]
    %v330 = vld [vmem:[#allocation3 + $0x1c8] sm:$0xff]
    %v331 = vld [vmem:[#allocation3 + $0x1d0] sm:$0xff]
    %v332 = vld [vmem:[#allocation3 + $0x1d8] sm:$0xff]
    %v333 = vld [vmem:[#allocation3 + $0x1e0] sm:$0xff]
    %v334 = vld [vmem:[#allocation3 + $0x1e8] sm:$0xff]
    %v335 = vld [vmem:[#allocation3 + $0x1f0] sm:$0xff]
    %v336 = vld [vmem:[#allocation3 + $0x1f8] sm:$0xff]
    %337 = vmatpush.msra.mxu0 %v333
    %338 = vmatpush.msra.mxu0 %v329
    %339 = vmatpush.msra.mxu0 %v325
    %340 = vmatpush.msra.mxu0 %v321
    %341 = vmatpush.msra.mxu0 %v317
    %342 = vmatpush.msra.mxu0 %v313
    %343 = vmatpush.msra.mxu0 %v309
    %344 = vmatpush.msra.mxu0 %v305
    %345 = vmatpush.msra.mxu0 %v301
    %346 = vmatpush.msra.mxu0 %v297
    %347 = vmatpush.msra.mxu0 %v293
    %348 = vmatpush.msra.mxu0 %v289
    %349 = vmatpush.msra.mxu0 %v285
    %350 = vmatpush.msra.mxu0 %v281
    %351 = vmatpush.msra.mxu0 %v277
    %352 = vmatpush.msra.mxu0 %v273
    %353 = vmatmul.f32.gmra.mxu0 %v264
    %v354 = vpop.f32.mrf.mxu0
    %v355 = vadd.f32 0.0, %v354
    %356 = vdwg.mxu0
    %357 = vmatpush.msra.mxu0 %v334
    %358 = vmatpush.msra.mxu0 %v330
    %359 = vmatpush.msra.mxu0 %v326
    %360 = vmatpush.msra.mxu0 %v322
    %361 = vmatpush.msra.mxu0 %v318
    %362 = vmatpush.msra.mxu0 %v314
    %363 = vmatpush.msra.mxu0 %v310
    %364 = vmatpush.msra.mxu0 %v306
    %365 = vmatpush.msra.mxu0 %v302
    %366 = vmatpush.msra.mxu0 %v298
    %367 = vmatpush.msra.mxu0 %v294
    %368 = vmatpush.msra.mxu0 %v290
    %369 = vmatpush.msra.mxu0 %v286
    %370 = vmatpush.msra.mxu0 %v282
    %371 = vmatpush.msra.mxu0 %v278
    %372 = vmatpush.msra.mxu0 %v274
    %373 = vmatmul.f32.gmra.mxu0 %v264
    %v374 = vpop.f32.mrf.mxu0
    %v375 = vadd.f32 0.0, %v374
    %376 = vdwg.mxu0
    %377 = vmatpush.msra.mxu0 %v335
    %378 = vmatpush.msra.mxu0 %v331
    %379 = vmatpush.msra.mxu0 %v327
    %380 = vmatpush.msra.mxu0 %v323
    %381 = vmatpush.msra.mxu0 %v319
    %382 = vmatpush.msra.mxu0 %v315
    %383 = vmatpush.msra.mxu0 %v311
    %384 = vmatpush.msra.mxu0 %v307
    %385 = vmatpush.msra.mxu0 %v303
    %386 = vmatpush.msra.mxu0 %v299
    %387 = vmatpush.msra.mxu0 %v295
    %388 = vmatpush.msra.mxu0 %v291
    %389 = vmatpush.msra.mxu0 %v287
    %390 = vmatpush.msra.mxu0 %v283
    %391 = vmatpush.msra.mxu0 %v279
    %392 = vmatpush.msra.mxu0 %v275
    %393 = vmatmul.f32.gmra.mxu0 %v264
    %v394 = vpop.f32.mrf.mxu0
    %v395 = vadd.f32 0.0, %v394
    %396 = vdwg.mxu0
    %397 = vmatpush.msra.mxu0 %v336
    %398 = vmatpush.msra.mxu0 %v332
    %399 = vmatpush.msra.mxu0 %v328
    %400 = vmatpush.msra.mxu0 %v324
    %401 = vmatpush.msra.mxu0 %v320
    %402 = vmatpush.msra.mxu0 %v316
    %403 = vmatpush.msra.mxu0 %v312
    %404 = vmatpush.msra.mxu0 %v308
    %405 = vmatpush.msra.mxu0 %v304
    %406 = vmatpush.msra.mxu0 %v300
    %407 = vmatpush.msra.mxu0 %v296
    %408 = vmatpush.msra.mxu0 %v292
    %409 = vmatpush.msra.mxu0 %v288
    %410 = vmatpush.msra.mxu0 %v284
    %411 = vmatpush.msra.mxu0 %v280
    %412 = vmatpush.msra.mxu0 %v276
    %413 = vmatmul.f32.gmra.mxu0 %v264
    %v414 = vpop.f32.mrf.mxu0
    %v415 = vadd.f32 0.0, %v414
    %416 = vdwg.mxu0
    %v417 = vadd.f32 %v269, %v355
    %v418 = vadd.f32 %v270, %v375
    %v419 = vadd.f32 %v271, %v395
    %v420 = vadd.f32 %v272, %v415
    %v421 = vmul.f32 %v417, 0.5
    %v422 = vmul.f32 %v418, 0.5
    %v423 = vmul.f32 %v419, 0.5
    %v424 = vtanh.pop %v421
    %v425 = vtanh.pop %v422
    %v426 = vtanh.pop %v423
    %v427 = vmul.f32 %v424, 0.5
    %v428 = vmul.f32 %v425, 0.5
    %v429 = vmul.f32 %v426, 0.5
    %v430 = vadd.f32 %v427, 0.5
    %v431 = vadd.f32 %v428, 0.5
    %v432 = vadd.f32 %v429, 0.5
    %v433 = vtanh.pop %v420
    %v434 = vmul.f32 %v431, %v265
    %v435 = vmul.f32 %v430, %v433
    %v436 = vadd.f32 %v434, %v435
    %v437 = vtanh.pop %v436
    %v438 = vmul.f32 %v432, %v437
    %s439 = smul.u32 2, 4
    %s440 = smul.addr %s439, 8
    %s441 = scalar_lea.vmem [#allocation2], %s440
    %v442 = vld [vmem:[%s441] sm:$0xff]
    %v443 = vld [vmem:[%s441 + $0x8] sm:$0xff]
    %v444 = vld [vmem:[%s441 + $0x10] sm:$0xff]
    %v445 = vld [vmem:[%s441 + $0x18] sm:$0xff]
    %446 = vmatpush.msra.mxu0 %v333
    %447 = vmatpush.msra.mxu0 %v329
    %448 = vmatpush.msra.mxu0 %v325
    %449 = vmatpush.msra.mxu0 %v321
    %450 = vmatpush.msra.mxu0 %v317
    %451 = vmatpush.msra.mxu0 %v313
    %452 = vmatpush.msra.mxu0 %v309
    %453 = vmatpush.msra.mxu0 %v305
    %454 = vmatpush.msra.mxu0 %v301
    %455 = vmatpush.msra.mxu0 %v297
    %456 = vmatpush.msra.mxu0 %v293
    %457 = vmatpush.msra.mxu0 %v289
    %458 = vmatpush.msra.mxu0 %v285
    %459 = vmatpush.msra.mxu0 %v281
    %460 = vmatpush.msra.mxu0 %v277
    %461 = vmatpush.msra.mxu0 %v273
    %462 = vmatmul.f32.gmra.mxu0 %v438
    %v463 = vpop.f32.mrf.mxu0
    %v464 = vadd.f32 0.0, %v463
    %465 = vdwg.mxu0
    %466 = vmatpush.msra.mxu0 %v334
    %467 = vmatpush.msra.mxu0 %v330
    %468 = vmatpush.msra.mxu0 %v326
    %469 = vmatpush.msra.mxu0 %v322
    %470 = vmatpush.msra.mxu0 %v318
    %471 = vmatpush.msra.mxu0 %v314
    %472 = vmatpush.msra.mxu0 %v310
    %473 = vmatpush.msra.mxu0 %v306
    %474 = vmatpush.msra.mxu0 %v302
    %475 = vmatpush.msra.mxu0 %v298
    %476 = vmatpush.msra.mxu0 %v294
    %477 = vmatpush.msra.mxu0 %v290
    %478 = vmatpush.msra.mxu0 %v286
    %479 = vmatpush.msra.mxu0 %v282
    %480 = vmatpush.msra.mxu0 %v278
    %481 = vmatpush.msra.mxu0 %v274
    %482 = vmatmul.f32.gmra.mxu0 %v438
    %v483 = vpop.f32.mrf.mxu0
    %v484 = vadd.f32 0.0, %v483
    %485 = vdwg.mxu0
    %486 = vmatpush.msra.mxu0 %v335
    %487 = vmatpush.msra.mxu0 %v331
    %488 = vmatpush.msra.mxu0 %v327
    %489 = vmatpush.msra.mxu0 %v323
    %490 = vmatpush.msra.mxu0 %v319
    %491 = vmatpush.msra.mxu0 %v315
    %492 = vmatpush.msra.mxu0 %v311
    %493 = vmatpush.msra.mxu0 %v307
    %494 = vmatpush.msra.mxu0 %v303
    %495 = vmatpush.msra.mxu0 %v299
    %496 = vmatpush.msra.mxu0 %v295
    %497 = vmatpush.msra.mxu0 %v291
    %498 = vmatpush.msra.mxu0 %v287
    %499 = vmatpush.msra.mxu0 %v283
    %500 = vmatpush.msra.mxu0 %v279
    %501 = vmatpush.msra.mxu0 %v275
    %502 = vmatmul.f32.gmra.mxu0 %v438
    %v503 = vpop.f32.mrf.mxu0
    %v504 = vadd.f32 0.0, %v503
    %505 = vdwg.mxu0
    %506 = vmatpush.msra.mxu0 %v336
    %507 = vmatpush.msra.mxu0 %v332
    %508 = vmatpush.msra.mxu0 %v328
    %509 = vmatpush.msra.mxu0 %v324
    %510 = vmatpush.msra.mxu0 %v320
    %511 = vmatpush.msra.mxu0 %v316
    %512 = vmatpush.msra.mxu0 %v312
    %513 = vmatpush.msra.mxu0 %v308
    %514 = vmatpush.msra.mxu0 %v304
    %515 = vmatpush.msra.mxu0 %v300
    %516 = vmatpush.msra.mxu0 %v296
    %517 = vmatpush.msra.mxu0 %v292
    %518 = vmatpush.msra.mxu0 %v288
    %519 = vmatpush.msra.mxu0 %v284
    %520 = vmatpush.msra.mxu0 %v280
    %521 = vmatpush.msra.mxu0 %v276
    %522 = vmatmul.f32.gmra.mxu0 %v438
    %v523 = vpop.f32.mrf.mxu0
    %v524 = vadd.f32 0.0, %v523
    %525 = vdwg.mxu0
    %v526 = vadd.f32 %v442, %v464
    %v527 = vadd.f32 %v443, %v484
    %v528 = vadd.f32 %v444, %v504
    %v529 = vadd.f32 %v445, %v524
    %v530 = vmul.f32 %v526, 0.5
    %v531 = vmul.f32 %v527, 0.5
    %v532 = vmul.f32 %v528, 0.5
    %v533 = vtanh.pop %v530
    %v534 = vtanh.pop %v531
    %v535 = vtanh.pop %v532
    %v536 = vmul.f32 %v533, 0.5
    %v537 = vmul.f32 %v534, 0.5
    %v538 = vmul.f32 %v535, 0.5
    %v539 = vadd.f32 %v536, 0.5
    %v540 = vadd.f32 %v537, 0.5
    %v541 = vadd.f32 %v538, 0.5
    %v542 = vtanh.pop %v529
    %v543 = vmul.f32 %v540, %v436
    %v544 = vmul.f32 %v539, %v542
    %v545 = vadd.f32 %v543, %v544
    %v546 = vtanh.pop %v545
    %v547 = vmul.f32 %v541, %v546
    %s548 = smul.u32 3, 4
    %s549 = smul.addr %s548, 8
    %s550 = scalar_lea.vmem [#allocation2], %s549
    %v551 = vld [vmem:[%s550] sm:$0xff]
    %v552 = vld [vmem:[%s550 + $0x8] sm:$0xff]
    %v553 = vld [vmem:[%s550 + $0x10] sm:$0xff]
    %v554 = vld [vmem:[%s550 + $0x18] sm:$0xff]
    %555 = vmatpush.msra.mxu0 %v333
    %556 = vmatpush.msra.mxu0 %v329
    %557 = vmatpush.msra.mxu0 %v325
    %558 = vmatpush.msra.mxu0 %v321
    %559 = vmatpush.msra.mxu0 %v317
    %560 = vmatpush.msra.mxu0 %v313
    %561 = vmatpush.msra.mxu0 %v309
    %562 = vmatpush.msra.mxu0 %v305
    %563 = vmatpush.msra.mxu0 %v301
    %564 = vmatpush.msra.mxu0 %v297
    %565 = vmatpush.msra.mxu0 %v293
    %566 = vmatpush.msra.mxu0 %v289
    %567 = vmatpush.msra.mxu0 %v285
    %568 = vmatpush.msra.mxu0 %v281
    %569 = vmatpush.msra.mxu0 %v277
    %570 = vmatpush.msra.mxu0 %v273
    %571 = vmatmul.f32.gmra.mxu0 %v547
    %v572 = vpop.f32.mrf.mxu0
    %v573 = vadd.f32 0.0, %v572
    %574 = vdwg.mxu0
    %575 = vmatpush.msra.mxu0 %v334
    %576 = vmatpush.msra.mxu0 %v330
    %577 = vmatpush.msra.mxu0 %v326
    %578 = vmatpush.msra.mxu0 %v322
    %579 = vmatpush.msra.mxu0 %v318
    %580 = vmatpush.msra.mxu0 %v314
    %581 = vmatpush.msra.mxu0 %v310
    %582 = vmatpush.msra.mxu0 %v306
    %583 = vmatpush.msra.mxu0 %v302
    %584 = vmatpush.msra.mxu0 %v298
    %585 = vmatpush.msra.mxu0 %v294
    %586 = vmatpush.msra.mxu0 %v290
    %587 = vmatpush.msra.mxu0 %v286
    %588 = vmatpush.msra.mxu0 %v282
    %589 = vmatpush.msra.mxu0 %v278
    %590 = vmatpush.msra.mxu0 %v274
    %591 = vmatmul.f32.gmra.mxu0 %v547
    %v592 = vpop.f32.mrf.mxu0
    %v593 = vadd.f32 0.0, %v592
    %594 = vdwg.mxu0
    %595 = vmatpush.msra.mxu0 %v335
    %596 = vmatpush.msra.mxu0 %v331
    %597 = vmatpush.msra.mxu0 %v327
    %598 = vmatpush.msra.mxu0 %v323
    %599 = vmatpush.msra.mxu0 %v319
    %600 = vmatpush.msra.mxu0 %v315
    %601 = vmatpush.msra.mxu0 %v311
    %602 = vmatpush.msra.mxu0 %v307
    %603 = vmatpush.msra.mxu0 %v303
    %604 = vmatpush.msra.mxu0 %v299
    %605 = vmatpush.msra.mxu0 %v295
    %606 = vmatpush.msra.mxu0 %v291
    %607 = vmatpush.msra.mxu0 %v287
    %608 = vmatpush.msra.mxu0 %v283
    %609 = vmatpush.msra.mxu0 %v279
    %610 = vmatpush.msra.mxu0 %v275
    %611 = vmatmul.f32.gmra.mxu0 %v547
    %v612 = vpop.f32.mrf.mxu0
    %v613 = vadd.f32 0.0, %v612
    %614 = vdwg.mxu0
    %615 = vmatpush.msra.mxu0 %v336
    %616 = vmatpush.msra.mxu0 %v332
    %617 = vmatpush.msra.mxu0 %v328
    %618 = vmatpush.msra.mxu0 %v324
    %619 = vmatpush.msra.mxu0 %v320
    %620 = vmatpush.msra.mxu0 %v316
    %621 = vmatpush.msra.mxu0 %v312
    %622 = vmatpush.msra.mxu0 %v308
    %623 = vmatpush.msra.mxu0 %v304
    %624 = vmatpush.msra.mxu0 %v300
    %625 = vmatpush.msra.mxu0 %v296
    %626 = vmatpush.msra.mxu0 %v292
    %627 = vmatpush.msra.mxu0 %v288
    %628 = vmatpush.msra.mxu0 %v284
    %629 = vmatpush.msra.mxu0 %v280
    %630 = vmatpush.msra.mxu0 %v276
    %631 = vmatmul.f32.gmra.mxu0 %v547
    %v632 = vpop.f32.mrf.mxu0
    %v633 = vadd.f32 0.0, %v632
    %634 = vdwg.mxu0
    %v635 = vadd.f32 %v551, %v573
    %v636 = vadd.f32 %v552, %v593
    %v637 = vadd.f32 %v553, %v613
    %v638 = vadd.f32 %v554, %v633
    %v639 = vmul.f32 %v635, 0.5
    %v640 = vmul.f32 %v636, 0.5
    %v641 = vmul.f32 %v637, 0.5
    %v642 = vtanh.pop %v639
    %v643 = vtanh.pop %v640
    %v644 = vtanh.pop %v641
    %v645 = vmul.f32 %v642, 0.5
    %v646 = vmul.f32 %v643, 0.5
    %v647 = vmul.f32 %v644, 0.5
    %v648 = vadd.f32 %v645, 0.5
    %v649 = vadd.f32 %v646, 0.5
    %v650 = vadd.f32 %v647, 0.5
    %v651 = vtanh.pop %v638
    %v652 = vmul.f32 %v649, %v545
    %v653 = vmul.f32 %v648, %v651
    %v654 = vadd.f32 %v652, %v653
    %v655 = vtanh.pop %v654
    %v656 = vmul.f32 %v650, %v655
    %s657 = smul.u32 4, 4
    %s658 = smul.addr %s657, 8
    %s659 = scalar_lea.vmem [#allocation2], %s658
    %v660 = vld [vmem:[%s659] sm:$0xff]
    %v661 = vld [vmem:[%s659 + $0x8] sm:$0xff]
    %v662 = vld [vmem:[%s659 + $0x10] sm:$0xff]
    %v663 = vld [vmem:[%s659 + $0x18] sm:$0xff]
    %664 = vmatpush.msra.mxu0 %v333
    %665 = vmatpush.msra.mxu0 %v329
    %666 = vmatpush.msra.mxu0 %v325
    %667 = vmatpush.msra.mxu0 %v321
    %668 = vmatpush.msra.mxu0 %v317
    %669 = vmatpush.msra.mxu0 %v313
    %670 = vmatpush.msra.mxu0 %v309
    %671 = vmatpush.msra.mxu0 %v305
    %672 = vmatpush.msra.mxu0 %v301
    %673 = vmatpush.msra.mxu0 %v297
    %674 = vmatpush.msra.mxu0 %v293
    %675 = vmatpush.msra.mxu0 %v289
    %676 = vmatpush.msra.mxu0 %v285
    %677 = vmatpush.msra.mxu0 %v281
    %678 = vmatpush.msra.mxu0 %v277
    %679 = vmatpush.msra.mxu0 %v273
    %680 = vmatmul.f32.gmra.mxu0 %v656
    %v681 = vpop.f32.mrf.mxu0
    %v682 = vadd.f32 0.0, %v681
    %683 = vdwg.mxu0
    %684 = vmatpush.msra.mxu0 %v334
    %685 = vmatpush.msra.mxu0 %v330
    %686 = vmatpush.msra.mxu0 %v326
    %687 = vmatpush.msra.mxu0 %v322
    %688 = vmatpush.msra.mxu0 %v318
    %689 = vmatpush.msra.mxu0 %v314
    %690 = vmatpush.msra.mxu0 %v310
    %691 = vmatpush.msra.mxu0 %v306
    %692 = vmatpush.msra.mxu0 %v302
    %693 = vmatpush.msra.mxu0 %v298
    %694 = vmatpush.msra.mxu0 %v294
    %695 = vmatpush.msra.mxu0 %v290
    %696 = vmatpush.msra.mxu0 %v286
    %697 = vmatpush.msra.mxu0 %v282
    %698 = vmatpush.msra.mxu0 %v278
    %699 = vmatpush.msra.mxu0 %v274
    %700 = vmatmul.f32.gmra.mxu0 %v656
    %v701 = vpop.f32.mrf.mxu0
    %v702 = vadd.f32 0.0, %v701
    %703 = vdwg.mxu0
    %704 = vmatpush.msra.mxu0 %v335
    %705 = vmatpush.msra.mxu0 %v331
    %706 = vmatpush.msra.mxu0 %v327
    %707 = vmatpush.msra.mxu0 %v323
    %708 = vmatpush.msra.mxu0 %v319
    %709 = vmatpush.msra.mxu0 %v315
    %710 = vmatpush.msra.mxu0 %v311
    %711 = vmatpush.msra.mxu0 %v307
    %712 = vmatpush.msra.mxu0 %v303
    %713 = vmatpush.msra.mxu0 %v299
    %714 = vmatpush.msra.mxu0 %v295
    %715 = vmatpush.msra.mxu0 %v291
    %716 = vmatpush.msra.mxu0 %v287
    %717 = vmatpush.msra.mxu0 %v283
    %718 = vmatpush.msra.mxu0 %v279
    %719 = vmatpush.msra.mxu0 %v275
    %720 = vmatmul.f32.gmra.mxu0 %v656
    %v721 = vpop.f32.mrf.mxu0
    %v722 = vadd.f32 0.0, %v721
    %723 = vdwg.mxu0
    %724 = vmatpush.msra.mxu0 %v336
    %725 = vmatpush.msra.mxu0 %v332
    %726 = vmatpush.msra.mxu0 %v328
    %727 = vmatpush.msra.mxu0 %v324
    %728 = vmatpush.msra.mxu0 %v320
    %729 = vmatpush.msra.mxu0 %v316
    %730 = vmatpush.msra.mxu0 %v312
    %731 = vmatpush.msra.mxu0 %v308
    %732 = vmatpush.msra.mxu0 %v304
    %733 = vmatpush.msra.mxu0 %v300
    %734 = vmatpush.msra.mxu0 %v296
    %735 = vmatpush.msra.mxu0 %v292
    %736 = vmatpush.msra.mxu0 %v288
    %737 = vmatpush.msra.mxu0 %v284
    %738 = vmatpush.msra.mxu0 %v280
    %739 = vmatpush.msra.mxu0 %v276
    %740 = vmatmul.f32.gmra.mxu0 %v656
    %v741 = vpop.f32.mrf.mxu0
    %v742 = vadd.f32 0.0, %v741
    %743 = vdwg.mxu0
    %v744 = vadd.f32 %v660, %v682
    %v745 = vadd.f32 %v661, %v702
    %v746 = vadd.f32 %v662, %v722
    %v747 = vadd.f32 %v663, %v742
    %v748 = vmul.f32 %v744, 0.5
    %v749 = vmul.f32 %v745, 0.5
    %v750 = vmul.f32 %v746, 0.5
    %v751 = vtanh.pop %v748
    %v752 = vtanh.pop %v749
    %v753 = vtanh.pop %v750
    %v754 = vmul.f32 %v751, 0.5
    %v755 = vmul.f32 %v752, 0.5
    %v756 = vmul.f32 %v753, 0.5
    %v757 = vadd.f32 %v754, 0.5
    %v758 = vadd.f32 %v755, 0.5
    %v759 = vadd.f32 %v756, 0.5
    %v760 = vtanh.pop %v747
    %v761 = vmul.f32 %v758, %v654
    %v762 = vmul.f32 %v757, %v760
    %v763 = vadd.f32 %v761, %v762
    %v764 = vtanh.pop %v763
    %v765 = vmul.f32 %v759, %v764
    %s766 = smul.u32 5, 4
    %s767 = smul.addr %s766, 8
    %s768 = scalar_lea.vmem [#allocation2], %s767
    %v769 = vld [vmem:[%s768] sm:$0xff]
    %v770 = vld [vmem:[%s768 + $0x8] sm:$0xff]
    %v771 = vld [vmem:[%s768 + $0x10] sm:$0xff]
    %v772 = vld [vmem:[%s768 + $0x18] sm:$0xff]
    %773 = vmatpush.msra.mxu0 %v333
    %774 = vmatpush.msra.mxu0 %v329
    %775 = vmatpush.msra.mxu0 %v325
    %776 = vmatpush.msra.mxu0 %v321
    %777 = vmatpush.msra.mxu0 %v317
    %778 = vmatpush.msra.mxu0 %v313
    %779 = vmatpush.msra.mxu0 %v309
    %780 = vmatpush.msra.mxu0 %v305
    %781 = vmatpush.msra.mxu0 %v301
    %782 = vmatpush.msra.mxu0 %v297
    %783 = vmatpush.msra.mxu0 %v293
    %784 = vmatpush.msra.mxu0 %v289
    %785 = vmatpush.msra.mxu0 %v285
    %786 = vmatpush.msra.mxu0 %v281
    %787 = vmatpush.msra.mxu0 %v277
    %788 = vmatpush.msra.mxu0 %v273
    %789 = vmatmul.f32.gmra.mxu0 %v765
    %v790 = vpop.f32.mrf.mxu0
    %v791 = vadd.f32 0.0, %v790
    %792 = vdwg.mxu0
    %793 = vmatpush.msra.mxu0 %v334
    %794 = vmatpush.msra.mxu0 %v330
    %795 = vmatpush.msra.mxu0 %v326
    %796 = vmatpush.msra.mxu0 %v322
    %797 = vmatpush.msra.mxu0 %v318
    %798 = vmatpush.msra.mxu0 %v314
    %799 = vmatpush.msra.mxu0 %v310
    %800 = vmatpush.msra.mxu0 %v306
    %801 = vmatpush.msra.mxu0 %v302
    %802 = vmatpush.msra.mxu0 %v298
    %803 = vmatpush.msra.mxu0 %v294
    %804 = vmatpush.msra.mxu0 %v290
    %805 = vmatpush.msra.mxu0 %v286
    %806 = vmatpush.msra.mxu0 %v282
    %807 = vmatpush.msra.mxu0 %v278
    %808 = vmatpush.msra.mxu0 %v274
    %809 = vmatmul.f32.gmra.mxu0 %v765
    %v810 = vpop.f32.mrf.mxu0
    %v811 = vadd.f32 0.0, %v810
    %812 = vdwg.mxu0
    %813 = vmatpush.msra.mxu0 %v335
    %814 = vmatpush.msra.mxu0 %v331
    %815 = vmatpush.msra.mxu0 %v327
    %816 = vmatpush.msra.mxu0 %v323
    %817 = vmatpush.msra.mxu0 %v319
    %818 = vmatpush.msra.mxu0 %v315
    %819 = vmatpush.msra.mxu0 %v311
    %820 = vmatpush.msra.mxu0 %v307
    %821 = vmatpush.msra.mxu0 %v303
    %822 = vmatpush.msra.mxu0 %v299
    %823 = vmatpush.msra.mxu0 %v295
    %824 = vmatpush.msra.mxu0 %v291
    %825 = vmatpush.msra.mxu0 %v287
    %826 = vmatpush.msra.mxu0 %v283
    %827 = vmatpush.msra.mxu0 %v279
    %828 = vmatpush.msra.mxu0 %v275
    %829 = vmatmul.f32.gmra.mxu0 %v765
    %v830 = vpop.f32.mrf.mxu0
    %v831 = vadd.f32 0.0, %v830
    %832 = vdwg.mxu0
    %833 = vmatpush.msra.mxu0 %v336
    %834 = vmatpush.msra.mxu0 %v332
    %835 = vmatpush.msra.mxu0 %v328
    %836 = vmatpush.msra.mxu0 %v324
    %837 = vmatpush.msra.mxu0 %v320
    %838 = vmatpush.msra.mxu0 %v316
    %839 = vmatpush.msra.mxu0 %v312
    %840 = vmatpush.msra.mxu0 %v308
    %841 = vmatpush.msra.mxu0 %v304
    %842 = vmatpush.msra.mxu0 %v300
    %843 = vmatpush.msra.mxu0 %v296
    %844 = vmatpush.msra.mxu0 %v292
    %845 = vmatpush.msra.mxu0 %v288
    %846 = vmatpush.msra.mxu0 %v284
    %847 = vmatpush.msra.mxu0 %v280
    %848 = vmatpush.msra.mxu0 %v276
    %849 = vmatmul.f32.gmra.mxu0 %v765
    %v850 = vpop.f32.mrf.mxu0
    %v851 = vadd.f32 0.0, %v850
    %852 = vdwg.mxu0
    %v853 = vadd.f32 %v769, %v791
    %v854 = vadd.f32 %v770, %v811
    %v855 = vadd.f32 %v771, %v831
    %v856 = vadd.f32 %v772, %v851
    %v857 = vmul.f32 %v853, 0.5
    %v858 = vmul.f32 %v854, 0.5
    %v859 = vmul.f32 %v855, 0.5
    %v860 = vtanh.pop %v857
    %v861 = vtanh.pop %v858
    %v862 = vtanh.pop %v859
    %v863 = vmul.f32 %v860, 0.5
    %v864 = vmul.f32 %v861, 0.5
    %v865 = vmul.f32 %v862, 0.5
    %v866 = vadd.f32 %v863, 0.5
    %v867 = vadd.f32 %v864, 0.5
    %v868 = vadd.f32 %v865, 0.5
    %v869 = vtanh.pop %v856
    %v870 = vmul.f32 %v867, %v763
    %v871 = vmul.f32 %v866, %v869
    %v872 = vadd.f32 %v870, %v871
    %v873 = vtanh.pop %v872
    %v874 = vmul.f32 %v868, %v873
    %s875 = smul.u32 6, 4
    %s876 = smul.addr %s875, 8
    %s877 = scalar_lea.vmem [#allocation2], %s876
    %v878 = vld [vmem:[%s877] sm:$0xff]
    %v879 = vld [vmem:[%s877 + $0x8] sm:$0xff]
    %v880 = vld [vmem:[%s877 + $0x10] sm:$0xff]
    %v881 = vld [vmem:[%s877 + $0x18] sm:$0xff]
    %882 = vmatpush.msra.mxu0 %v333
    %883 = vmatpush.msra.mxu0 %v329
    %884 = vmatpush.msra.mxu0 %v325
    %885 = vmatpush.msra.mxu0 %v321
    %886 = vmatpush.msra.mxu0 %v317
    %887 = vmatpush.msra.mxu0 %v313
    %888 = vmatpush.msra.mxu0 %v309
    %889 = vmatpush.msra.mxu0 %v305
    %890 = vmatpush.msra.mxu0 %v301
    %891 = vmatpush.msra.mxu0 %v297
    %892 = vmatpush.msra.mxu0 %v293
    %893 = vmatpush.msra.mxu0 %v289
    %894 = vmatpush.msra.mxu0 %v285
    %895 = vmatpush.msra.mxu0 %v281
    %896 = vmatpush.msra.mxu0 %v277
    %897 = vmatpush.msra.mxu0 %v273
    %898 = vmatmul.f32.gmra.mxu0 %v874
    %v899 = vpop.f32.mrf.mxu0
    %v900 = vadd.f32 0.0, %v899
    %901 = vdwg.mxu0
    %902 = vmatpush.msra.mxu0 %v334
    %903 = vmatpush.msra.mxu0 %v330
    %904 = vmatpush.msra.mxu0 %v326
    %905 = vmatpush.msra.mxu0 %v322
    %906 = vmatpush.msra.mxu0 %v318
    %907 = vmatpush.msra.mxu0 %v314
    %908 = vmatpush.msra.mxu0 %v310
    %909 = vmatpush.msra.mxu0 %v306
    %910 = vmatpush.msra.mxu0 %v302
    %911 = vmatpush.msra.mxu0 %v298
    %912 = vmatpush.msra.mxu0 %v294
    %913 = vmatpush.msra.mxu0 %v290
    %914 = vmatpush.msra.mxu0 %v286
    %915 = vmatpush.msra.mxu0 %v282
    %916 = vmatpush.msra.mxu0 %v278
    %917 = vmatpush.msra.mxu0 %v274
    %918 = vmatmul.f32.gmra.mxu0 %v874
    %v919 = vpop.f32.mrf.mxu0
    %v920 = vadd.f32 0.0, %v919
    %921 = vdwg.mxu0
    %922 = vmatpush.msra.mxu0 %v335
    %923 = vmatpush.msra.mxu0 %v331
    %924 = vmatpush.msra.mxu0 %v327
    %925 = vmatpush.msra.mxu0 %v323
    %926 = vmatpush.msra.mxu0 %v319
    %927 = vmatpush.msra.mxu0 %v315
    %928 = vmatpush.msra.mxu0 %v311
    %929 = vmatpush.msra.mxu0 %v307
    %930 = vmatpush.msra.mxu0 %v303
    %931 = vmatpush.msra.mxu0 %v299
    %932 = vmatpush.msra.mxu0 %v295
    %933 = vmatpush.msra.mxu0 %v291
    %934 = vmatpush.msra.mxu0 %v287
    %935 = vmatpush.msra.mxu0 %v283
    %936 = vmatpush.msra.mxu0 %v279
    %937 = vmatpush.msra.mxu0 %v275
    %938 = vmatmul.f32.gmra.mxu0 %v874
    %v939 = vpop.f32.mrf.mxu0
    %v940 = vadd.f32 0.0, %v939
    %941 = vdwg.mxu0
    %942 = vmatpush.msra.mxu0 %v336
    %943 = vmatpush.msra.mxu0 %v332
    %944 = vmatpush.msra.mxu0 %v328
    %945 = vmatpush.msra.mxu0 %v324
    %946 = vmatpush.msra.mxu0 %v320
    %947 = vmatpush.msra.mxu0 %v316
    %948 = vmatpush.msra.mxu0 %v312
    %949 = vmatpush.msra.mxu0 %v308
    %950 = vmatpush.msra.mxu0 %v304
    %951 = vmatpush.msra.mxu0 %v300
    %952 = vmatpush.msra.mxu0 %v296
    %953 = vmatpush.msra.mxu0 %v292
    %954 = vmatpush.msra.mxu0 %v288
    %955 = vmatpush.msra.mxu0 %v284
    %956 = vmatpush.msra.mxu0 %v280
    %957 = vmatpush.msra.mxu0 %v276
    %958 = vmatmul.f32.gmra.mxu0 %v874
    %v959 = vpop.f32.mrf.mxu0
    %v960 = vadd.f32 0.0, %v959
    %961 = vdwg.mxu0
    %v962 = vadd.f32 %v878, %v900
    %v963 = vadd.f32 %v879, %v920
    %v964 = vadd.f32 %v880, %v940
    %v965 = vadd.f32 %v881, %v960
    %v966 = vmul.f32 %v962, 0.5
    %v967 = vmul.f32 %v963, 0.5
    %v968 = vmul.f32 %v964, 0.5
    %v969 = vtanh.pop %v966
    %v970 = vtanh.pop %v967
    %v971 = vtanh.pop %v968
    %v972 = vmul.f32 %v969, 0.5
    %v973 = vmul.f32 %v970, 0.5
    %v974 = vmul.f32 %v971, 0.5
    %v975 = vadd.f32 %v972, 0.5
    %v976 = vadd.f32 %v973, 0.5
    %v977 = vadd.f32 %v974, 0.5
    %v978 = vtanh.pop %v965
    %v979 = vmul.f32 %v976, %v872
    %v980 = vmul.f32 %v975, %v978
    %v981 = vadd.f32 %v979, %v980
    %v982 = vtanh.pop %v981
    %v983 = vmul.f32 %v977, %v982
    %s984 = smul.u32 7, 4
    %s985 = smul.addr %s984, 8
    %s986 = scalar_lea.vmem [#allocation2], %s985
    %v987 = vld [vmem:[%s986] sm:$0xff]
    %v988 = vld [vmem:[%s986 + $0x8] sm:$0xff]
    %v989 = vld [vmem:[%s986 + $0x10] sm:$0xff]
    %v990 = vld [vmem:[%s986 + $0x18] sm:$0xff]
    %991 = vmatpush.msra.mxu0 %v333
    %992 = vmatpush.msra.mxu0 %v329
    %993 = vmatpush.msra.mxu0 %v325
    %994 = vmatpush.msra.mxu0 %v321
    %995 = vmatpush.msra.mxu0 %v317
    %996 = vmatpush.msra.mxu0 %v313
    %997 = vmatpush.msra.mxu0 %v309
    %998 = vmatpush.msra.mxu0 %v305
    %999 = vmatpush.msra.mxu0 %v301
    %1000 = vmatpush.msra.mxu0 %v297
    %1001 = vmatpush.msra.mxu0 %v293
    %1002 = vmatpush.msra.mxu0 %v289
    %1003 = vmatpush.msra.mxu0 %v285
    %1004 = vmatpush.msra.mxu0 %v281
    %1005 = vmatpush.msra.mxu0 %v277
    %1006 = vmatpush.msra.mxu0 %v273
    %1007 = vmatmul.f32.gmra.mxu0 %v983
    %v1008 = vpop.f32.mrf.mxu0
    %v1009 = vadd.f32 0.0, %v1008
    %1010 = vdwg.mxu0
    %1011 = vmatpush.msra.mxu0 %v334
    %1012 = vmatpush.msra.mxu0 %v330
    %1013 = vmatpush.msra.mxu0 %v326
    %1014 = vmatpush.msra.mxu0 %v322
    %1015 = vmatpush.msra.mxu0 %v318
    %1016 = vmatpush.msra.mxu0 %v314
    %1017 = vmatpush.msra.mxu0 %v310
    %1018 = vmatpush.msra.mxu0 %v306
    %1019 = vmatpush.msra.mxu0 %v302
    %1020 = vmatpush.msra.mxu0 %v298
    %1021 = vmatpush.msra.mxu0 %v294
    %1022 = vmatpush.msra.mxu0 %v290
    %1023 = vmatpush.msra.mxu0 %v286
    %1024 = vmatpush.msra.mxu0 %v282
    %1025 = vmatpush.msra.mxu0 %v278
    %1026 = vmatpush.msra.mxu0 %v274
    %1027 = vmatmul.f32.gmra.mxu0 %v983
    %v1028 = vpop.f32.mrf.mxu0
    %v1029 = vadd.f32 0.0, %v1028
    %1030 = vdwg.mxu0
    %1031 = vmatpush.msra.mxu0 %v335
    %1032 = vmatpush.msra.mxu0 %v331
    %1033 = vmatpush.msra.mxu0 %v327
    %1034 = vmatpush.msra.mxu0 %v323
    %1035 = vmatpush.msra.mxu0 %v319
    %1036 = vmatpush.msra.mxu0 %v315
    %1037 = vmatpush.msra.mxu0 %v311
    %1038 = vmatpush.msra.mxu0 %v307
    %1039 = vmatpush.msra.mxu0 %v303
    %1040 = vmatpush.msra.mxu0 %v299
    %1041 = vmatpush.msra.mxu0 %v295
    %1042 = vmatpush.msra.mxu0 %v291
    %1043 = vmatpush.msra.mxu0 %v287
    %1044 = vmatpush.msra.mxu0 %v283
    %1045 = vmatpush.msra.mxu0 %v279
    %1046 = vmatpush.msra.mxu0 %v275
    %1047 = vmatmul.f32.gmra.mxu0 %v983
    %v1048 = vpop.f32.mrf.mxu0
    %v1049 = vadd.f32 0.0, %v1048
    %1050 = vdwg.mxu0
    %1051 = vmatpush.msra.mxu0 %v336
    %1052 = vmatpush.msra.mxu0 %v332
    %1053 = vmatpush.msra.mxu0 %v328
    %1054 = vmatpush.msra.mxu0 %v324
    %1055 = vmatpush.msra.mxu0 %v320
    %1056 = vmatpush.msra.mxu0 %v316
    %1057 = vmatpush.msra.mxu0 %v312
    %1058 = vmatpush.msra.mxu0 %v308
    %1059 = vmatpush.msra.mxu0 %v304
    %1060 = vmatpush.msra.mxu0 %v300
    %1061 = vmatpush.msra.mxu0 %v296
    %1062 = vmatpush.msra.mxu0 %v292
    %1063 = vmatpush.msra.mxu0 %v288
    %1064 = vmatpush.msra.mxu0 %v284
    %1065 = vmatpush.msra.mxu0 %v280
    %1066 = vmatpush.msra.mxu0 %v276
    %1067 = vmatmul.f32.gmra.mxu0 %v983
    %v1068 = vpop.f32.mrf.mxu0
    %v1069 = vadd.f32 0.0, %v1068
    %1070 = vdwg.mxu0
    %v1071 = vadd.f32 %v987, %v1009
    %v1072 = vadd.f32 %v988, %v1029
    %v1073 = vadd.f32 %v989, %v1049
    %v1074 = vadd.f32 %v990, %v1069
    %v1075 = vmul.f32 %v1071, 0.5
    %v1076 = vmul.f32 %v1072, 0.5
    %v1077 = vmul.f32 %v1073, 0.5
    %v1078 = vtanh.pop %v1075
    %v1079 = vtanh.pop %v1076
    %v1080 = vtanh.pop %v1077
    %v1081 = vmul.f32 %v1078, 0.5
    %v1082 = vmul.f32 %v1079, 0.5
    %v1083 = vmul.f32 %v1080, 0.5
    %v1084 = vadd.f32 %v1081, 0.5
    %v1085 = vadd.f32 %v1082, 0.5
    %v1086 = vadd.f32 %v1083, 0.5
    %v1087 = vtanh.pop %v1074
    %v1088 = vmul.f32 %v1085, %v981
    %v1089 = vmul.f32 %v1084, %v1087
    %v1090 = vadd.f32 %v1088, %v1089
    %v1091 = vtanh.pop %v1090
    %v1092 = vmul.f32 %v1086, %v1091
    %s1093 = smul.u32 8, 4
    %s1094 = smul.addr %s1093, 8
    %s1095 = scalar_lea.vmem [#allocation2], %s1094
    %v1096 = vld [vmem:[%s1095] sm:$0xff]
    %v1097 = vld [vmem:[%s1095 + $0x8] sm:$0xff]
    %v1098 = vld [vmem:[%s1095 + $0x10] sm:$0xff]
    %v1099 = vld [vmem:[%s1095 + $0x18] sm:$0xff]
    %1100 = vmatpush.msra.mxu0 %v333
    %1101 = vmatpush.msra.mxu0 %v329
    %1102 = vmatpush.msra.mxu0 %v325
    %1103 = vmatpush.msra.mxu0 %v321
    %1104 = vmatpush.msra.mxu0 %v317
    %1105 = vmatpush.msra.mxu0 %v313
    %1106 = vmatpush.msra.mxu0 %v309
    %1107 = vmatpush.msra.mxu0 %v305
    %1108 = vmatpush.msra.mxu0 %v301
    %1109 = vmatpush.msra.mxu0 %v297
    %1110 = vmatpush.msra.mxu0 %v293
    %1111 = vmatpush.msra.mxu0 %v289
    %1112 = vmatpush.msra.mxu0 %v285
    %1113 = vmatpush.msra.mxu0 %v281
    %1114 = vmatpush.msra.mxu0 %v277
    %1115 = vmatpush.msra.mxu0 %v273
    %1116 = vmatmul.f32.gmra.mxu0 %v1092
    %v1117 = vpop.f32.mrf.mxu0
    %v1118 = vadd.f32 0.0, %v1117
    %1119 = vdwg.mxu0
    %1120 = vmatpush.msra.mxu0 %v334
    %1121 = vmatpush.msra.mxu0 %v330
    %1122 = vmatpush.msra.mxu0 %v326
    %1123 = vmatpush.msra.mxu0 %v322
    %1124 = vmatpush.msra.mxu0 %v318
    %1125 = vmatpush.msra.mxu0 %v314
    %1126 = vmatpush.msra.mxu0 %v310
    %1127 = vmatpush.msra.mxu0 %v306
    %1128 = vmatpush.msra.mxu0 %v302
    %1129 = vmatpush.msra.mxu0 %v298
    %1130 = vmatpush.msra.mxu0 %v294
    %1131 = vmatpush.msra.mxu0 %v290
    %1132 = vmatpush.msra.mxu0 %v286
    %1133 = vmatpush.msra.mxu0 %v282
    %1134 = vmatpush.msra.mxu0 %v278
    %1135 = vmatpush.msra.mxu0 %v274
    %1136 = vmatmul.f32.gmra.mxu0 %v1092
    %v1137 = vpop.f32.mrf.mxu0
    %v1138 = vadd.f32 0.0, %v1137
    %1139 = vdwg.mxu0
    %1140 = vmatpush.msra.mxu0 %v335
    %1141 = vmatpush.msra.mxu0 %v331
    %1142 = vmatpush.msra.mxu0 %v327
    %1143 = vmatpush.msra.mxu0 %v323
    %1144 = vmatpush.msra.mxu0 %v319
    %1145 = vmatpush.msra.mxu0 %v315
    %1146 = vmatpush.msra.mxu0 %v311
    %1147 = vmatpush.msra.mxu0 %v307
    %1148 = vmatpush.msra.mxu0 %v303
    %1149 = vmatpush.msra.mxu0 %v299
    %1150 = vmatpush.msra.mxu0 %v295
    %1151 = vmatpush.msra.mxu0 %v291
    %1152 = vmatpush.msra.mxu0 %v287
    %1153 = vmatpush.msra.mxu0 %v283
    %1154 = vmatpush.msra.mxu0 %v279
    %1155 = vmatpush.msra.mxu0 %v275
    %1156 = vmatmul.f32.gmra.mxu0 %v1092
    %v1157 = vpop.f32.mrf.mxu0
    %v1158 = vadd.f32 0.0, %v1157
    %1159 = vdwg.mxu0
    %1160 = vmatpush.msra.mxu0 %v336
    %1161 = vmatpush.msra.mxu0 %v332
    %1162 = vmatpush.msra.mxu0 %v328
    %1163 = vmatpush.msra.mxu0 %v324
    %1164 = vmatpush.msra.mxu0 %v320
    %1165 = vmatpush.msra.mxu0 %v316
    %1166 = vmatpush.msra.mxu0 %v312
    %1167 = vmatpush.msra.mxu0 %v308
    %1168 = vmatpush.msra.mxu0 %v304
    %1169 = vmatpush.msra.mxu0 %v300
    %1170 = vmatpush.msra.mxu0 %v296
    %1171 = vmatpush.msra.mxu0 %v292
    %1172 = vmatpush.msra.mxu0 %v288
    %1173 = vmatpush.msra.mxu0 %v284
    %1174 = vmatpush.msra.mxu0 %v280
    %1175 = vmatpush.msra.mxu0 %v276
    %1176 = vmatmul.f32.gmra.mxu0 %v1092
    %v1177 = vpop.f32.mrf.mxu0
    %v1178 = vadd.f32 0.0, %v1177
    %1179 = vdwg.mxu0
    %v1180 = vadd.f32 %v1096, %v1118
    %v1181 = vadd.f32 %v1097, %v1138
    %v1182 = vadd.f32 %v1098, %v1158
    %v1183 = vadd.f32 %v1099, %v1178
    %v1184 = vmul.f32 %v1180, 0.5
    %v1185 = vmul.f32 %v1181, 0.5
    %v1186 = vmul.f32 %v1182, 0.5
    %v1187 = vtanh.pop %v1184
    %v1188 = vtanh.pop %v1185
    %v1189 = vtanh.pop %v1186
    %v1190 = vmul.f32 %v1187, 0.5
    %v1191 = vmul.f32 %v1188, 0.5
    %v1192 = vmul.f32 %v1189, 0.5
    %v1193 = vadd.f32 %v1190, 0.5
    %v1194 = vadd.f32 %v1191, 0.5
    %v1195 = vadd.f32 %v1192, 0.5
    %v1196 = vtanh.pop %v1183
    %v1197 = vmul.f32 %v1194, %v1090
    %v1198 = vmul.f32 %v1193, %v1196
    %v1199 = vadd.f32 %v1197, %v1198
    %v1200 = vtanh.pop %v1199
    %v1201 = vmul.f32 %v1195, %v1200
    %v1202 = vld [vmem:[#allocation5] sm:$0xff]
    %v1203 = vld [vmem:[#allocation5 + $0x8] sm:$0xff]
    %v1204 = vld [vmem:[#allocation5 + $0x10] sm:$0xff]
    %v1205 = vld [vmem:[#allocation5 + $0x18] sm:$0xff]
    %v1206 = vld [vmem:[#allocation5 + $0x20] sm:$0xff]
    %v1207 = vld [vmem:[#allocation5 + $0x28] sm:$0xff]
    %v1208 = vld [vmem:[#allocation5 + $0x30] sm:$0xff]
    %v1209 = vld [vmem:[#allocation5 + $0x38] sm:$0xff]
    %v1210 = vld [vmem:[#allocation5 + $0x40] sm:$0xff]
    %v1211 = vld [vmem:[#allocation5 + $0x48] sm:$0xff]
    %v1212 = vld [vmem:[#allocation5 + $0x50] sm:$0xff]
    %v1213 = vld [vmem:[#allocation5 + $0x58] sm:$0xff]
    %v1214 = vld [vmem:[#allocation5 + $0x60] sm:$0xff]
    %v1215 = vld [vmem:[#allocation5 + $0x68] sm:$0xff]
    %v1216 = vld [vmem:[#allocation5 + $0x70] sm:$0xff]
    %v1217 = vld [vmem:[#allocation5 + $0x78] sm:$0xff]
    %v1218 = vld [vmem:[%s5] sm:$0x1]
    %v1220 = vperm.slane %v1218, 0
    %1222 = vmatpush.msra.mxu0 %v1217
    %1223 = vmatpush.msra.mxu0 %v1216
    %1224 = vmatpush.msra.mxu0 %v1215
    %1225 = vmatpush.msra.mxu0 %v1214
    %1226 = vmatpush.msra.mxu0 %v1213
    %1227 = vmatpush.msra.mxu0 %v1212
    %1228 = vmatpush.msra.mxu0 %v1211
    %1229 = vmatpush.msra.mxu0 %v1210
    %1230 = vmatpush.msra.mxu0 %v1209
    %1231 = vmatpush.msra.mxu0 %v1208
    %1232 = vmatpush.msra.mxu0 %v1207
    %1233 = vmatpush.msra.mxu0 %v1206
    %1234 = vmatpush.msra.mxu0 %v1205
    %1235 = vmatpush.msra.mxu0 %v1204
    %1236 = vmatpush.msra.mxu0 %v1203
    %1237 = vmatpush.msra.mxu0 %v1202
    %1238 = vmatmul.f32.gmra.mxu0 %v1201
    %v1239 = vpop.f32.mrf.mxu0
    %v1240 = vadd.f32 %v1220, %v1239
    %1241 = vdwg.mxu0
    %1242 = vst [vmem:[%s6] sm:$0xff] %v1240
    // Predicated region
    $region34: #{lstm_model_forward.1} parent=1 // pred_check
      _
    $region35: #{lstm_model_forward.1} parent=1 // pred_check_branch
      %1244 = sbr.rel (0) target = $region37
    $region36: #{lstm_model_forward.1} parent=1 // pred_region
      _
    $region37: #{lstm_model_forward.1} parent=1 // pred_fallthru
      _
    // Predicated region
    $region38: #{lstm_model_forward.1} parent=1 // pred_check
      _
    $region39: #{lstm_model_forward.1} parent=1 // pred_check_branch
      %1246 = sbr.rel (0) target = $region41
    $region40: #{lstm_model_forward.1} parent=1 // pred_region
      _
    $region41: #{lstm_model_forward.1} parent=1 // pred_fallthru
      _
    %1247 = vsyncpa [#allocation4], 1
    %1248 = vsyncpa [#allocation6], 1

</llo_original>
